<compile_context>
chip_gen: v5e
topology: v5e:2x2
jax: 0.10.0
libtpu: 0.0.40
codegen_flags: <defaults>
</compile_context>

<pallas_src>
import functools

import jax
import jax.numpy as jnp
from jax.experimental import pallas as pl
from jax.experimental.pallas import tpu as pltpu

HIDDEN_DIM = 512
BN_EPS = 1e-5
NORM_EPS = 1e-12          # matches F.normalize default eps
TM_CAP = 512              # rows per tile (review: 256 was overhead-dominated)


def _round_up(x, m):
    return (x + m - 1) // m * m


def _num_tensorcores():
    """2 TensorCores per chip on v7x; 1 on v5e/v6e. Heuristic, safe fallback = 1."""
    try:
        kind = jax.devices()[0].device_kind.lower()
    except Exception:
        return 1
    return 2 if "v7" in kind else 1


def _choose_row_tiling(n_rows, n_cores):
    """Pick (padded_rows, row_tile) so padded_rows = row_tile * steps >= n_rows."""
    if n_rows < 8:
        return n_rows, n_rows              # single full-array block, no padding
    mp = _round_up(n_rows, 8)
    steps = pl.cdiv(mp, TM_CAP)
    if n_cores > 1:
        if steps == 1 and mp >= 32:
            steps = n_cores                # split one big tile across both TCs
        elif steps > 1:
            steps = _round_up(steps, n_cores)   # load-balance the "parallel" axis
    tm = _round_up(pl.cdiv(mp, steps), 8)
    return tm * steps, tm


# --------------------------- Pallas kernel ----------------------------------

def _projection_kernel(x_ref, w1_ref, shift_ref, w2_ref, bias_ref, o_ref):
    """One row-tile of the whole projection head.

    x_ref     : [TM, Kp]  f32    input rows (cast to bf16 in-kernel)
    w1_ref    : [Kp, Hp]  bf16   Linear1 weight^T with BN scale pre-folded
    shift_ref : [1,  Hp]  f32    folded BN shift  (beta - mean * scale)
    w2_ref    : [Hp, Dp]  bf16   Linear2 weight^T
    bias_ref  : [1,  Dp]  f32    Linear2 bias
    o_ref     : [TM, Dp]  f32    L2-normalized output rows
    """
    # Linear(1024 -> 512, bias=False) with BN scale folded into the weight.
    xb = x_ref[...].astype(jnp.bfloat16)
    h = jnp.dot(xb, w1_ref[...], preferred_element_type=jnp.float32)
    # BatchNorm1d (eval mode, scale folded) + ReLU fused.
    h = jnp.maximum(h + shift_ref[...], 0.0)
    # Linear(512 -> 128, bias=True).
    y = jnp.dot(h.astype(jnp.bfloat16), w2_ref[...],
                preferred_element_type=jnp.float32)
    y = y + bias_ref[...]
    # F.normalize(dim=1): per-row rsqrt (EUP) + one vector multiply.
    # Padded output columns are exactly zero, so they do not perturb the norm.
    ss = jnp.sum(y * y, axis=-1, keepdims=True)
    inv = jax.lax.rsqrt(jnp.maximum(ss, NORM_EPS * NORM_EPS))
    o_ref[...] = y * inv


def projection_forward(params, x, *, out_dim):
    """x: [N, input_dim] float -> [N, out_dim] float32, rows L2-normalized."""
    N, K = x.shape
    w1, w2 = params["w1"], params["w2"]
    shift, bias = params["shift"], params["bias"]
    Kp, Hp = w1.shape
    _, Dp = w2.shape

    Mp, TM = _choose_row_tiling(N, _num_tensorcores())

    # Only materialize padding when strictly required (K = 1024 is already a
    # multiple of 128, so the lane pad is a no-op for the default module).
    if Mp != N or Kp != K:
        x = jnp.pad(x, ((0, Mp - N), (0, Kp - K)))

    out = pl.pallas_call(
        _projection_kernel,
        out_shape=jax.ShapeDtypeStruct((Mp, Dp), jnp.float32),
        grid=(Mp // TM,),
        in_specs=[
            pl.BlockSpec((TM, Kp), lambda i: (i, 0)),   # x rows
            pl.BlockSpec((Kp, Hp), lambda i: (0, 0)),   # W1^T * scale (resident)
            pl.BlockSpec((1, Hp), lambda i: (0, 0)),    # BN shift
            pl.BlockSpec((Hp, Dp), lambda i: (0, 0)),   # W2^T (resident)
            pl.BlockSpec((1, Dp), lambda i: (0, 0)),    # bias
        ],
        out_specs=pl.BlockSpec((TM, Dp), lambda i: (i, 0)),
        compiler_params=pltpu.CompilerParams(
            dimension_semantics=("parallel",)),
    )(x, w1, shift, w2, bias)
    return out[:N, :out_dim]


# --------------------------- Parameters -------------------------------------

def init_raw_params(key, input_dim=1024, output_dim=128):
    """PyTorch-layout parameters of the Projection module (deterministic)."""
    k1, k2, k3 = jax.random.split(key, 3)
    lim1 = 1.0 / (input_dim ** 0.5)
    lim2 = 1.0 / (HIDDEN_DIM ** 0.5)
    return {
        "w1": jax.random.uniform(k1, (HIDDEN_DIM, input_dim), jnp.float32,
                                 -lim1, lim1),                     # Linear1 (no bias)
        "w2": jax.random.uniform(k2, (output_dim, HIDDEN_DIM), jnp.float32,
                                 -lim2, lim2),                     # Linear2
        "b2": jax.random.uniform(k3, (output_dim,), jnp.float32, -lim2, lim2),
        "gamma": jnp.ones((HIDDEN_DIM,), jnp.float32),             # BN params /
        "beta": jnp.zeros((HIDDEN_DIM,), jnp.float32),             # running stats
        "mean": jnp.zeros((HIDDEN_DIM,), jnp.float32),
        "var": jnp.ones((HIDDEN_DIM,), jnp.float32),
    }


def pack_projection_params(w1, w2, b2, gamma, beta, mean, var):
    """Fold BN into W1/shift, transpose/pad to lane-aligned shapes, cast to bf16 (once)."""
    H, K = w1.shape
    D, _ = w2.shape
    Kp, Hp, Dp = _round_up(K, 128), _round_up(H, 128), _round_up(D, 128)
    scale = gamma / jnp.sqrt(var + BN_EPS)          # f32
    shift = beta - mean * scale
    w1_folded = w1.T * scale[None, :]               # fold BN scale in f32, THEN cast
    return {
        "w1": jnp.pad(w1_folded, ((0, Kp - K), (0, Hp - H))).astype(jnp.bfloat16),
        "w2": jnp.pad(w2.T, ((0, Hp - H), (0, Dp - D))).astype(jnp.bfloat16),
        "shift": jnp.pad(shift, (0, Hp - H)).reshape(1, Hp),
        "bias": jnp.pad(b2, (0, Dp - D)).reshape(1, Dp),
    }


# --------------------------- Pure-JAX reference ------------------------------

def reference_forward(w1, w2, b2, gamma, beta, mean, var, x):
    h = x @ w1.T
    scale = gamma / jnp.sqrt(var + BN_EPS)
    h = h * scale + (beta - mean * scale)
    h = jnp.maximum(h, 0.0)
    y = h @ w2.T + b2
    n = jnp.sqrt(jnp.sum(y * y, axis=1, keepdims=True))
    return y / jnp.maximum(n, NORM_EPS)


# --------------------------- main --------------------------------------------

if __name__ == "__main__":
    key = jax.random.PRNGKey(0)
    pkey, xkey = jax.random.split(key)

    INPUT_DIM, OUTPUT_DIM, BATCH = 1024, 128, 2
    raw = init_raw_params(pkey, INPUT_DIM, OUTPUT_DIM)
    params = pack_projection_params(**raw)

    x = jax.random.normal(xkey, (BATCH, INPUT_DIM), dtype=jnp.float32)

    fwd = jax.jit(functools.partial(projection_forward, out_dim=OUTPUT_DIM))
    out = jax.block_until_ready(fwd(params, x))

    assert out.shape == (BATCH, OUTPUT_DIM), out.shape
    assert bool(jnp.all(jnp.isfinite(out)))
    # Output rows must be unit-norm (F.normalize semantics).
    norms = jnp.linalg.norm(out, axis=1)
    assert bool(jnp.all(jnp.abs(norms - 1.0) < 1e-3)), norms
    # Agreement with the f32 reference (bf16 MXU inputs -> loose tolerance).
    ref = reference_forward(x=x, **raw)
    assert bool(jnp.max(jnp.abs(out - ref)) < 5e-2)

    # Exercise a larger, multi-tile batch (non-multiple of the tile) as well.
    x_big = jax.random.normal(xkey, (1030, INPUT_DIM), dtype=jnp.float32)
    out_big = jax.block_until_ready(fwd(params, x_big))
    ref_big = reference_forward(x=x_big, **raw)
    assert out_big.shape == (1030, OUTPUT_DIM)
    assert bool(jnp.max(jnp.abs(out_big - ref_big)) < 5e-2)

    print("KERNEL_OK")
</pallas_src>

<mosaic_0001>
module attributes {stable_mosaic.version = 11 : i64} {
  func.func @_projection_kernel(%arg0: i32, %arg1: memref<2x1024xf32, #tpu.memory_space<vmem>>, %arg2: memref<1024x512xbf16, #tpu.memory_space<vmem>>, %arg3: memref<1x512xf32, #tpu.memory_space<vmem>>, %arg4: memref<512x128xbf16, #tpu.memory_space<vmem>>, %arg5: memref<1x128xf32, #tpu.memory_space<vmem>>, %arg6: memref<2x128xf32, #tpu.memory_space<vmem>>) attributes {dimension_semantics = [#tpu.dimension_semantics<parallel>], iteration_bounds = array<i64: 1>, scalar_prefetch = 0 : i64, scratch_operands = 0 : i64, tpu.core_type = #tpu.core_type<tc>, window_params = [{transform_indices = @transform_0, window_bounds = array<i64: 2, 1024>}, {pipeline_mode = #tpu.pipeline_mode<synchronous>, transform_indices = @transform_1, window_bounds = array<i64: 1024, 512>}, {pipeline_mode = #tpu.pipeline_mode<synchronous>, transform_indices = @transform_2, window_bounds = array<i64: 1, 512>}, {pipeline_mode = #tpu.pipeline_mode<synchronous>, transform_indices = @transform_3, window_bounds = array<i64: 512, 128>}, {pipeline_mode = #tpu.pipeline_mode<synchronous>, transform_indices = @transform_4, window_bounds = array<i64: 1, 128>}, {transform_indices = @transform_5, window_bounds = array<i64: 2, 128>}]} {
    %c0 = arith.constant 0 : index
    %c0_0 = arith.constant 0 : index
    %0 = vector.load %arg1[%c0, %c0_0] : memref<2x1024xf32, #tpu.memory_space<vmem>>, vector<2x1024xf32>
    %1 = arith.truncf %0 : vector<2x1024xf32> to vector<2x1024xbf16>
    %c0_1 = arith.constant 0 : index
    %c0_2 = arith.constant 0 : index
    %2 = vector.load %arg2[%c0_1, %c0_2] : memref<1024x512xbf16, #tpu.memory_space<vmem>>, vector<1024x512xbf16>
    %cst = arith.constant dense<0.000000e+00> : vector<2x512xf32>
    %3 = tpu.matmul %1, %2, %cst {dimension_numbers = #tpu.dot_dimension_numbers<[1], [0], [0], [1], [0, 0, 1, 1], [], []>} : vector<2x1024xbf16>, vector<1024x512xbf16>, vector<2x512xf32> -> vector<2x512xf32>
    %c0_3 = arith.constant 0 : index
    %c0_4 = arith.constant 0 : index
    %4 = vector.load %arg3[%c0_3, %c0_4] : memref<1x512xf32, #tpu.memory_space<vmem>>, vector<1x512xf32>
    %5 = vector.broadcast %4 : vector<1x512xf32> to vector<2x512xf32>
    %6 = arith.addf %3, %5 : vector<2x512xf32>
    %cst_5 = arith.constant 0.000000e+00 : f32
    %7 = vector.broadcast %cst_5 : f32 to vector<2x512xf32>
    %8 = arith.maximumf %6, %7 : vector<2x512xf32>
    %9 = arith.truncf %8 : vector<2x512xf32> to vector<2x512xbf16>
    %c0_6 = arith.constant 0 : index
    %c0_7 = arith.constant 0 : index
    %10 = vector.load %arg4[%c0_6, %c0_7] : memref<512x128xbf16, #tpu.memory_space<vmem>>, vector<512x128xbf16>
    %cst_8 = arith.constant dense<0.000000e+00> : vector<2x128xf32>
    %11 = tpu.matmul %9, %10, %cst_8 {dimension_numbers = #tpu.dot_dimension_numbers<[1], [0], [0], [1], [0, 0, 1, 1], [], []>} : vector<2x512xbf16>, vector<512x128xbf16>, vector<2x128xf32> -> vector<2x128xf32>
    %c0_9 = arith.constant 0 : index
    %c0_10 = arith.constant 0 : index
    %12 = vector.load %arg5[%c0_9, %c0_10] : memref<1x128xf32, #tpu.memory_space<vmem>>, vector<1x128xf32>
    %13 = vector.broadcast %12 : vector<1x128xf32> to vector<2x128xf32>
    %14 = arith.addf %11, %13 : vector<2x128xf32>
    %15 = arith.mulf %14, %14 : vector<2x128xf32>
    %cst_11 = arith.constant dense<0.000000e+00> : vector<2xf32>
    %16 = vector.multi_reduction <add>, %15, %cst_11 [1] : vector<2x128xf32> to vector<2xf32>
    %17 = vector.shape_cast %16 : vector<2xf32> to vector<2x1xf32>
    %cst_12 = arith.constant 1.000000e-24 : f32
    %18 = vector.broadcast %cst_12 : f32 to vector<2x1xf32>
    %19 = arith.maximumf %17, %18 : vector<2x1xf32>
    %20 = math.rsqrt %19 : vector<2x1xf32>
    %21 = vector.broadcast %20 : vector<2x1xf32> to vector<2x128xf32>
    %22 = arith.mulf %14, %21 : vector<2x128xf32>
    %c0_13 = arith.constant 0 : index
    %c0_14 = arith.constant 0 : index
    %23 = vector.load %arg6[%c0_13, %c0_14] : memref<2x128xf32, #tpu.memory_space<vmem>>, vector<2x128xf32>
    tpu.vector_store %arg6[%c0_13, %c0_14], %22 {strides = array<i32>} : memref<2x128xf32, #tpu.memory_space<vmem>>, vector<2x128xf32>,
    return
  }
  func.func @transform_0(%arg0: i32) -> (i32, i32) {
    %c0_i32 = arith.constant 0 : i32
    %c0_i32_0 = arith.constant 0 : i32
    return %arg0, %c0_i32 : i32, i32
  }
  func.func @transform_1(%arg0: i32) -> (i32, i32) {
    %c0_i32 = arith.constant 0 : i32
    %c0_i32_0 = arith.constant 0 : i32
    %c0_i32_1 = arith.constant 0 : i32
    return %c0_i32, %c0_i32_0 : i32, i32
  }
  func.func @transform_2(%arg0: i32) -> (i32, i32) {
    %c0_i32 = arith.constant 0 : i32
    %c0_i32_0 = arith.constant 0 : i32
    %c0_i32_1 = arith.constant 0 : i32
    return %c0_i32, %c0_i32_0 : i32, i32
  }
  func.func @transform_3(%arg0: i32) -> (i32, i32) {
    %c0_i32 = arith.constant 0 : i32
    %c0_i32_0 = arith.constant 0 : i32
    %c0_i32_1 = arith.constant 0 : i32
    return %c0_i32, %c0_i32_0 : i32, i32
  }
  func.func @transform_4(%arg0: i32) -> (i32, i32) {
    %c0_i32 = arith.constant 0 : i32
    %c0_i32_0 = arith.constant 0 : i32
    %c0_i32_1 = arith.constant 0 : i32
    return %c0_i32, %c0_i32_0 : i32, i32
  }
  func.func @transform_5(%arg0: i32) -> (i32, i32) {
    %c0_i32 = arith.constant 0 : i32
    %c0_i32_0 = arith.constant 0 : i32
    return %arg0, %c0_i32 : i32, i32
  }
}

</mosaic_0001>

<llo_original>
// kernel: projection_forward.1
$region0: #{projection_forward.1}
  #allocation0 [shape = 'u32[]', space=smem, size = 0x4, offset = 0x4, fixed_abs, tag = 'smem constant byte address 0x4 - core index']
  #allocation1 [shape = 'u32[72,128]{1,0:T(1,128)}', space=vmem, size = 0x9000, scoped, tag = 'internal scratch']
  %s0 = inlined_call_operand.hbm [shape: f32[2,1024], index: 0, kind: input, shape index: {}]
  %s1 = inlined_call_operand.hbm [shape: bf16[1024,512], index: 1, kind: input, shape index: {}]
  %s2 = inlined_call_operand.hbm [shape: f32[1,512], index: 2, kind: input, shape index: {}]
  %s3 = inlined_call_operand.hbm [shape: bf16[512,128], index: 3, kind: input, shape index: {}]
  %s4 = inlined_call_operand.hbm [shape: f32[1,128], index: 4, kind: input, shape index: {}]
  %s5 = inlined_call_operand.hbm [shape: f32[2,128], index: 5, kind: output, shape index: {}]
  %s6 = sld [smem:[#allocation0]]
  $region50: #{projection_forward.1} parent=0
    _
  %s8 = ssub.s32 1, %s6
  %s9 = scalar_select 0, %s8, %s6
  $region1: #{projection_forward.1} parent=0
    #allocation2 [shape = 'u8[8192]{0}', space=vmem, size = 0x2000, scoped, tag = 'input window, operand 0, single buffered']
    #allocation3 [shape = 's32[1]{0}', space=sflag, size = 0x4, scoped, tag = 'scoped memory for projection_forward.1']
    #allocation4 [shape = 's32[1]{0}', space=sflag, size = 0x4, scoped, tag = 'scoped memory for projection_forward.1']
    #allocation5 [shape = 'u8[1048576]{0}', space=vmem, size = 0x100000, scoped, tag = 'input window, operand 1, single buffered']
    #allocation6 [shape = 's32[1]{0}', space=sflag, size = 0x4, scoped, tag = 'scoped memory for projection_forward.1']
    #allocation7 [shape = 'u8[2048]{0}', space=vmem, size = 0x800, scoped, tag = 'input window, operand 2, single buffered']
    #allocation8 [shape = 'u8[131072]{0}', space=vmem, size = 0x20000, scoped, tag = 'input window, operand 3, single buffered']
    #allocation9 [shape = 's32[1]{0}', space=sflag, size = 0x4, scoped, tag = 'scoped memory for projection_forward.1']
    #allocation10 [shape = 'u8[512]{0}', space=vmem, size = 0x400, scoped, tag = 'input window, operand 4, single buffered']
    #allocation11 [shape = 'u8[1024]{0}', space=vmem, size = 0x400, scoped, tag = 'output window, operand 0, single buffered']
    %10 = vsyncpa [#allocation3], 0
    %11 = vsyncpa [#allocation6], 0
    %12 = vsyncpa [#allocation9], 0
    %13 = vsyncpa [#allocation4], 0
    // Predicated region
    $region2: #{projection_forward.1} parent=1 // pred_check
      _
    $region3: #{projection_forward.1} parent=1 // pred_check_branch
      %15 = sbr.rel (0) target = $region5
    $region4: #{projection_forward.1} parent=1 // pred_region
      %17 = vsyncadd [#allocation3], 0
      %s19 = sshll.u32 %s0, 4
      %s20 = int_to_ptr.hbm [resolvable:$true] %s19
      %s21 = sshll.u32 [#allocation2], 4
      %s22 = int_to_ptr.vmem [resolvable:$true] %s21
      %24 = dma.hbm_to_vmem [thread:$0]  %s20, 256, %s22, [#allocation3]
    $region5: #{projection_forward.1} parent=1 // pred_fallthru
      _
    // Predicated region
    $region6: #{projection_forward.1} parent=1 // pred_check
      _
    $region7: #{projection_forward.1} parent=1 // pred_check_branch
      %26 = sbr.rel (0) target = $region9
    $region8: #{projection_forward.1} parent=1 // pred_region
      %28 = vsyncadd [#allocation6], 0
      %s29 = sshll.u32 %s1, 4
      %s30 = int_to_ptr.hbm [resolvable:$true] %s29
      %s31 = sshll.u32 [#allocation5], 4
      %s32 = int_to_ptr.vmem [resolvable:$true] %s31
      %37 = dma.hbm_to_vmem [thread:$0]  %s30, 32768, %s32, [#allocation6], 256, 256, 16
    $region9: #{projection_forward.1} parent=1 // pred_fallthru
      _
    // Predicated region
    $region10: #{projection_forward.1} parent=1 // pred_check
      _
    $region11: #{projection_forward.1} parent=1 // pred_check_branch
      %39 = sbr.rel (0) target = $region13
    $region12: #{projection_forward.1} parent=1 // pred_region
      %41 = vsyncadd [#allocation6], 0
      %s43 = sshll.u32 %s2, 4
      %s44 = int_to_ptr.hbm [resolvable:$true] %s43
      %s45 = sshll.u32 [#allocation7], 4
      %s46 = int_to_ptr.vmem [resolvable:$true] %s45
      %48 = dma.hbm_to_vmem [thread:$0]  %s44, 64, %s46, [#allocation6]
    $region13: #{projection_forward.1} parent=1 // pred_fallthru
      _
    // Predicated region
    $region14: #{projection_forward.1} parent=1 // pred_check
      _
    $region15: #{projection_forward.1} parent=1 // pred_check_branch
      %50 = sbr.rel (0) target = $region17
    $region16: #{projection_forward.1} parent=1 // pred_region
      %52 = vsyncadd [#allocation9], 0
      %s53 = sshll.u32 %s3, 4
      %s54 = int_to_ptr.hbm [resolvable:$true] %s53
      %s55 = sshll.u32 [#allocation8], 4
      %s56 = int_to_ptr.vmem [resolvable:$true] %s55
      %61 = dma.hbm_to_vmem [thread:$0]  %s54, 4096, %s56, [#allocation9], 64, 64, 4
    $region17: #{projection_forward.1} parent=1 // pred_fallthru
      _
    // Predicated region
    $region18: #{projection_forward.1} parent=1 // pred_check
      _
    $region19: #{projection_forward.1} parent=1 // pred_check_branch
      %63 = sbr.rel (0) target = $region21
    $region20: #{projection_forward.1} parent=1 // pred_region
      %65 = vsyncadd [#allocation9], 0
      %s67 = sshll.u32 %s4, 4
      %s68 = int_to_ptr.hbm [resolvable:$true] %s67
      %s69 = sshll.u32 [#allocation10], 4
      %s70 = int_to_ptr.vmem [resolvable:$true] %s69
      %72 = dma.hbm_to_vmem [thread:$0]  %s68, 16, %s70, [#allocation9]
    $region21: #{projection_forward.1} parent=1 // pred_fallthru
      _
    // Predicated region
    $region22: #{projection_forward.1} parent=1 // pred_check
      _
    $region23: #{projection_forward.1} parent=1 // pred_check_branch
      %74 = sbr.rel (0) target = $region25
    $region24: #{projection_forward.1} parent=1 // pred_region
      %76 = dma.done [#allocation3], 256
    $region25: #{projection_forward.1} parent=1 // pred_fallthru
      _
    // Predicated region
    $region26: #{projection_forward.1} parent=1 // pred_check
      _
    $region27: #{projection_forward.1} parent=1 // pred_check_branch
      %78 = sbr.rel (0) target = $region29
    $region28: #{projection_forward.1} parent=1 // pred_region
      %80 = dma.done [#allocation6], 32768
    $region29: #{projection_forward.1} parent=1 // pred_fallthru
      _
    // Predicated region
    $region30: #{projection_forward.1} parent=1 // pred_check
      _
    $region31: #{projection_forward.1} parent=1 // pred_check_branch
      %82 = sbr.rel (0) target = $region33
    $region32: #{projection_forward.1} parent=1 // pred_region
      %84 = dma.done [#allocation6], 64
    $region33: #{projection_forward.1} parent=1 // pred_fallthru
      _
    // Predicated region
    $region34: #{projection_forward.1} parent=1 // pred_check
      _
    $region35: #{projection_forward.1} parent=1 // pred_check_branch
      %86 = sbr.rel (0) target = $region37
    $region36: #{projection_forward.1} parent=1 // pred_region
      %88 = dma.done [#allocation9], 4096
    $region37: #{projection_forward.1} parent=1 // pred_fallthru
      _
    // Predicated region
    $region38: #{projection_forward.1} parent=1 // pred_check
      _
    $region39: #{projection_forward.1} parent=1 // pred_check_branch
      %90 = sbr.rel (0) target = $region41
    $region40: #{projection_forward.1} parent=1 // pred_region
      %92 = dma.done [#allocation9], 16
    $region41: #{projection_forward.1} parent=1 // pred_fallthru
      _
    %v93 = vld [vmem:[#allocation2] sm:$0xff]
    %v94 = vld [vmem:[#allocation2 + $0x8] sm:$0xff]
    %97 = vst [vmem:[#allocation1] ss:$4 sm:$0xff] %v93
    %s98 = scalar_lea.vmem [#allocation1], 32
    %99 = vst [vmem:[%s98] ss:$4 sm:$0xff] %v94
    %v100 = vld.sshfl [vmem:[#allocation1] sm:$0xff pattern:$0x73625140]
    %v101 = vld.sshfl [vmem:[#allocation1 + $0x8] sm:$0xff pattern:$0x73625140]
    %v102 = vld.sshfl [vmem:[#allocation1 + $0x10] sm:$0xff pattern:$0x73625140]
    %v103 = vld.sshfl [vmem:[#allocation1 + $0x18] sm:$0xff pattern:$0x73625140]
    %v104 = vld.sshfl [vmem:[#allocation1 + $0x20] sm:$0xff pattern:$0x73625140]
    %v105 = vld.sshfl [vmem:[#allocation1 + $0x28] sm:$0xff pattern:$0x73625140]
    %v106 = vld.sshfl [vmem:[#allocation1 + $0x30] sm:$0xff pattern:$0x73625140]
    %v107 = vld.sshfl [vmem:[#allocation1 + $0x38] sm:$0xff pattern:$0x73625140]
    %v116 = vpack.c.bf16 %v100, %v100
    %v117 = vpack.c.bf16 %v101, %v101
    %v118 = vpack.c.bf16 %v102, %v102
    %v119 = vpack.c.bf16 %v103, %v103
    %v120 = vpack.c.bf16 %v104, %v104
    %v121 = vpack.c.bf16 %v105, %v105
    %v122 = vpack.c.bf16 %v106, %v106
    %v123 = vpack.c.bf16 %v107, %v107
    %v124 = vld [vmem:[#allocation5] sm:$0xff]
    %v125 = vld [vmem:[#allocation5 + $0x8] sm:$0xff]
    %v126 = vld [vmem:[#allocation5 + $0x10] sm:$0xff]
    %v127 = vld [vmem:[#allocation5 + $0x18] sm:$0xff]
    %v128 = vld [vmem:[#allocation5 + $0x20] sm:$0xff]
    %v129 = vld [vmem:[#allocation5 + $0x28] sm:$0xff]
    %v130 = vld [vmem:[#allocation5 + $0x30] sm:$0xff]
    %v131 = vld [vmem:[#allocation5 + $0x38] sm:$0xff]
    %v132 = vld [vmem:[#allocation5 + $0x40] sm:$0xff]
    %v133 = vld [vmem:[#allocation5 + $0x48] sm:$0xff]
    %v134 = vld [vmem:[#allocation5 + $0x50] sm:$0xff]
    %v135 = vld [vmem:[#allocation5 + $0x58] sm:$0xff]
    %v136 = vld [vmem:[#allocation5 + $0x60] sm:$0xff]
    %v137 = vld [vmem:[#allocation5 + $0x68] sm:$0xff]
    %v138 = vld [vmem:[#allocation5 + $0x70] sm:$0xff]
    %v139 = vld [vmem:[#allocation5 + $0x78] sm:$0xff]
    %v140 = vld [vmem:[#allocation5 + $0x80] sm:$0xff]
    %v141 = vld [vmem:[#allocation5 + $0x88] sm:$0xff]
    %v142 = vld [vmem:[#allocation5 + $0x90] sm:$0xff]
    %v143 = vld [vmem:[#allocation5 + $0x98] sm:$0xff]
    %v144 = vld [vmem:[#allocation5 + $0xa0] sm:$0xff]
    %v145 = vld [vmem:[#allocation5 + $0xa8] sm:$0xff]
    %v146 = vld [vmem:[#allocation5 + $0xb0] sm:$0xff]
    %v147 = vld [vmem:[#allocation5 + $0xb8] sm:$0xff]
    %v148 = vld [vmem:[#allocation5 + $0xc0] sm:$0xff]
    %v149 = vld [vmem:[#allocation5 + $0xc8] sm:$0xff]
    %v150 = vld [vmem:[#allocation5 + $0xd0] sm:$0xff]
    %v151 = vld [vmem:[#allocation5 + $0xd8] sm:$0xff]
    %v152 = vld [vmem:[#allocation5 + $0xe0] sm:$0xff]
    %v153 = vld [vmem:[#allocation5 + $0xe8] sm:$0xff]
    %v154 = vld [vmem:[#allocation5 + $0xf0] sm:$0xff]
    %v155 = vld [vmem:[#allocation5 + $0xf8] sm:$0xff]
    %v156 = vld [vmem:[#allocation5 + $0x100] sm:$0xff]
    %v157 = vld [vmem:[#allocation5 + $0x108] sm:$0xff]
    %v158 = vld [vmem:[#allocation5 + $0x110] sm:$0xff]
    %v159 = vld [vmem:[#allocation5 + $0x118] sm:$0xff]
    %v160 = vld [vmem:[#allocation5 + $0x120] sm:$0xff]
    %v161 = vld [vmem:[#allocation5 + $0x128] sm:$0xff]
    %v162 = vld [vmem:[#allocation5 + $0x130] sm:$0xff]
    %v163 = vld [vmem:[#allocation5 + $0x138] sm:$0xff]
    %v164 = vld [vmem:[#allocation5 + $0x140] sm:$0xff]
    %v165 = vld [vmem:[#allocation5 + $0x148] sm:$0xff]
    %v166 = vld [vmem:[#allocation5 + $0x150] sm:$0xff]
    %v167 = vld [vmem:[#allocation5 + $0x158] sm:$0xff]
    %v168 = vld [vmem:[#allocation5 + $0x160] sm:$0xff]
    %v169 = vld [vmem:[#allocation5 + $0x168] sm:$0xff]
    %v170 = vld [vmem:[#allocation5 + $0x170] sm:$0xff]
    %v171 = vld [vmem:[#allocation5 + $0x178] sm:$0xff]
    %v172 = vld [vmem:[#allocation5 + $0x180] sm:$0xff]
    %v173 = vld [vmem:[#allocation5 + $0x188] sm:$0xff]
    %v174 = vld [vmem:[#allocation5 + $0x190] sm:$0xff]
    %v175 = vld [vmem:[#allocation5 + $0x198] sm:$0xff]
    %v176 = vld [vmem:[#allocation5 + $0x1a0] sm:$0xff]
    %v177 = vld [vmem:[#allocation5 + $0x1a8] sm:$0xff]
    %v178 = vld [vmem:[#allocation5 + $0x1b0] sm:$0xff]
    %v179 = vld [vmem:[#allocation5 + $0x1b8] sm:$0xff]
    %v180 = vld [vmem:[#allocation5 + $0x1c0] sm:$0xff]
    %v181 = vld [vmem:[#allocation5 + $0x1c8] sm:$0xff]
    %v182 = vld [vmem:[#allocation5 + $0x1d0] sm:$0xff]
    %v183 = vld [vmem:[#allocation5 + $0x1d8] sm:$0xff]
    %v184 = vld [vmem:[#allocation5 + $0x1e0] sm:$0xff]
    %v185 = vld [vmem:[#allocation5 + $0x1e8] sm:$0xff]
    %v186 = vld [vmem:[#allocation5 + $0x1f0] sm:$0xff]
    %v187 = vld [vmem:[#allocation5 + $0x1f8] sm:$0xff]
    %v188 = vld [vmem:[#allocation5 + $0x200] sm:$0xff]
    %v189 = vld [vmem:[#allocation5 + $0x208] sm:$0xff]
    %v190 = vld [vmem:[#allocation5 + $0x210] sm:$0xff]
    %v191 = vld [vmem:[#allocation5 + $0x218] sm:$0xff]
    %v192 = vld [vmem:[#allocation5 + $0x220] sm:$0xff]
    %v193 = vld [vmem:[#allocation5 + $0x228] sm:$0xff]
    %v194 = vld [vmem:[#allocation5 + $0x230] sm:$0xff]
    %v195 = vld [vmem:[#allocation5 + $0x238] sm:$0xff]
    %v196 = vld [vmem:[#allocation5 + $0x240] sm:$0xff]
    %v197 = vld [vmem:[#allocation5 + $0x248] sm:$0xff]
    %v198 = vld [vmem:[#allocation5 + $0x250] sm:$0xff]
    %v199 = vld [vmem:[#allocation5 + $0x258] sm:$0xff]
    %v200 = vld [vmem:[#allocation5 + $0x260] sm:$0xff]
    %v201 = vld [vmem:[#allocation5 + $0x268] sm:$0xff]
    %v202 = vld [vmem:[#allocation5 + $0x270] sm:$0xff]
    %v203 = vld [vmem:[#allocation5 + $0x278] sm:$0xff]
    %v204 = vld [vmem:[#allocation5 + $0x280] sm:$0xff]
    %v205 = vld [vmem:[#allocation5 + $0x288] sm:$0xff]
    %v206 = vld [vmem:[#allocation5 + $0x290] sm:$0xff]
    %v207 = vld [vmem:[#allocation5 + $0x298] sm:$0xff]
    %v208 = vld [vmem:[#allocation5 + $0x2a0] sm:$0xff]
    %v209 = vld [vmem:[#allocation5 + $0x2a8] sm:$0xff]
    %v210 = vld [vmem:[#allocation5 + $0x2b0] sm:$0xff]
    %v211 = vld [vmem:[#allocation5 + $0x2b8] sm:$0xff]
    %v212 = vld [vmem:[#allocation5 + $0x2c0] sm:$0xff]
    %v213 = vld [vmem:[#allocation5 + $0x2c8] sm:$0xff]
    %v214 = vld [vmem:[#allocation5 + $0x2d0] sm:$0xff]
    %v215 = vld [vmem:[#allocation5 + $0x2d8] sm:$0xff]
    %v216 = vld [vmem:[#allocation5 + $0x2e0] sm:$0xff]
    %v217 = vld [vmem:[#allocation5 + $0x2e8] sm:$0xff]
    %v218 = vld [vmem:[#allocation5 + $0x2f0] sm:$0xff]
    %v219 = vld [vmem:[#allocation5 + $0x2f8] sm:$0xff]
    %v220 = vld [vmem:[#allocation5 + $0x300] sm:$0xff]
    %v221 = vld [vmem:[#allocation5 + $0x308] sm:$0xff]
    %v222 = vld [vmem:[#allocation5 + $0x310] sm:$0xff]
    %v223 = vld [vmem:[#allocation5 + $0x318] sm:$0xff]
    %v224 = vld [vmem:[#allocation5 + $0x320] sm:$0xff]
    %v225 = vld [vmem:[#allocation5 + $0x328] sm:$0xff]
    %v226 = vld [vmem:[#allocation5 + $0x330] sm:$0xff]
    %v227 = vld [vmem:[#allocation5 + $0x338] sm:$0xff]
    %v228 = vld [vmem:[#allocation5 + $0x340] sm:$0xff]
    %v229 = vld [vmem:[#allocation5 + $0x348] sm:$0xff]
    %v230 = vld [vmem:[#allocation5 + $0x350] sm:$0xff]
    %v231 = vld [vmem:[#allocation5 + $0x358] sm:$0xff]
    %v232 = vld [vmem:[#allocation5 + $0x360] sm:$0xff]
    %v233 = vld [vmem:[#allocation5 + $0x368] sm:$0xff]
    %v234 = vld [vmem:[#allocation5 + $0x370] sm:$0xff]
    %v235 = vld [vmem:[#allocation5 + $0x378] sm:$0xff]
    %v236 = vld [vmem:[#allocation5 + $0x380] sm:$0xff]
    %v237 = vld [vmem:[#allocation5 + $0x388] sm:$0xff]
    %v238 = vld [vmem:[#allocation5 + $0x390] sm:$0xff]
    %v239 = vld [vmem:[#allocation5 + $0x398] sm:$0xff]
    %v240 = vld [vmem:[#allocation5 + $0x3a0] sm:$0xff]
    %v241 = vld [vmem:[#allocation5 + $0x3a8] sm:$0xff]
    %v242 = vld [vmem:[#allocation5 + $0x3b0] sm:$0xff]
    %v243 = vld [vmem:[#allocation5 + $0x3b8] sm:$0xff]
    %v244 = vld [vmem:[#allocation5 + $0x3c0] sm:$0xff]
    %v245 = vld [vmem:[#allocation5 + $0x3c8] sm:$0xff]
    %v246 = vld [vmem:[#allocation5 + $0x3d0] sm:$0xff]
    %v247 = vld [vmem:[#allocation5 + $0x3d8] sm:$0xff]
    %v248 = vld [vmem:[#allocation5 + $0x3e0] sm:$0xff]
    %v249 = vld [vmem:[#allocation5 + $0x3e8] sm:$0xff]
    %v250 = vld [vmem:[#allocation5 + $0x3f0] sm:$0xff]
    %v251 = vld [vmem:[#allocation5 + $0x3f8] sm:$0xff]
    %v252 = vld [vmem:[#allocation5 + $0x400] sm:$0xff]
    %v253 = vld [vmem:[#allocation5 + $0x408] sm:$0xff]
    %v254 = vld [vmem:[#allocation5 + $0x410] sm:$0xff]
    %v255 = vld [vmem:[#allocation5 + $0x418] sm:$0xff]
    %v256 = vld [vmem:[#allocation5 + $0x420] sm:$0xff]
    %v257 = vld [vmem:[#allocation5 + $0x428] sm:$0xff]
    %v258 = vld [vmem:[#allocation5 + $0x430] sm:$0xff]
    %v259 = vld [vmem:[#allocation5 + $0x438] sm:$0xff]
    %v260 = vld [vmem:[#allocation5 + $0x440] sm:$0xff]
    %v261 = vld [vmem:[#allocation5 + $0x448] sm:$0xff]
    %v262 = vld [vmem:[#allocation5 + $0x450] sm:$0xff]
    %v263 = vld [vmem:[#allocation5 + $0x458] sm:$0xff]
    %v264 = vld [vmem:[#allocation5 + $0x460] sm:$0xff]
    %v265 = vld [vmem:[#allocation5 + $0x468] sm:$0xff]
    %v266 = vld [vmem:[#allocation5 + $0x470] sm:$0xff]
    %v267 = vld [vmem:[#allocation5 + $0x478] sm:$0xff]
    %v268 = vld [vmem:[#allocation5 + $0x480] sm:$0xff]
    %v269 = vld [vmem:[#allocation5 + $0x488] sm:$0xff]
    %v270 = vld [vmem:[#allocation5 + $0x490] sm:$0xff]
    %v271 = vld [vmem:[#allocation5 + $0x498] sm:$0xff]
    %v272 = vld [vmem:[#allocation5 + $0x4a0] sm:$0xff]
    %v273 = vld [vmem:[#allocation5 + $0x4a8] sm:$0xff]
    %v274 = vld [vmem:[#allocation5 + $0x4b0] sm:$0xff]
    %v275 = vld [vmem:[#allocation5 + $0x4b8] sm:$0xff]
    %v276 = vld [vmem:[#allocation5 + $0x4c0] sm:$0xff]
    %v277 = vld [vmem:[#allocation5 + $0x4c8] sm:$0xff]
    %v278 = vld [vmem:[#allocation5 + $0x4d0] sm:$0xff]
    %v279 = vld [vmem:[#allocation5 + $0x4d8] sm:$0xff]
    %v280 = vld [vmem:[#allocation5 + $0x4e0] sm:$0xff]
    %v281 = vld [vmem:[#allocation5 + $0x4e8] sm:$0xff]
    %v282 = vld [vmem:[#allocation5 + $0x4f0] sm:$0xff]
    %v283 = vld [vmem:[#allocation5 + $0x4f8] sm:$0xff]
    %v284 = vld [vmem:[#allocation5 + $0x500] sm:$0xff]
    %v285 = vld [vmem:[#allocation5 + $0x508] sm:$0xff]
    %v286 = vld [vmem:[#allocation5 + $0x510] sm:$0xff]
    %v287 = vld [vmem:[#allocation5 + $0x518] sm:$0xff]
    %v288 = vld [vmem:[#allocation5 + $0x520] sm:$0xff]
    %v289 = vld [vmem:[#allocation5 + $0x528] sm:$0xff]
    %v290 = vld [vmem:[#allocation5 + $0x530] sm:$0xff]
    %v291 = vld [vmem:[#allocation5 + $0x538] sm:$0xff]
    %v292 = vld [vmem:[#allocation5 + $0x540] sm:$0xff]
    %v293 = vld [vmem:[#allocation5 + $0x548] sm:$0xff]
    %v294 = vld [vmem:[#allocation5 + $0x550] sm:$0xff]
    %v295 = vld [vmem:[#allocation5 + $0x558] sm:$0xff]
    %v296 = vld [vmem:[#allocation5 + $0x560] sm:$0xff]
    %v297 = vld [vmem:[#allocation5 + $0x568] sm:$0xff]
    %v298 = vld [vmem:[#allocation5 + $0x570] sm:$0xff]
    %v299 = vld [vmem:[#allocation5 + $0x578] sm:$0xff]
    %v300 = vld [vmem:[#allocation5 + $0x580] sm:$0xff]
    %v301 = vld [vmem:[#allocation5 + $0x588] sm:$0xff]
    %v302 = vld [vmem:[#allocation5 + $0x590] sm:$0xff]
    %v303 = vld [vmem:[#allocation5 + $0x598] sm:$0xff]
    %v304 = vld [vmem:[#allocation5 + $0x5a0] sm:$0xff]
    %v305 = vld [vmem:[#allocation5 + $0x5a8] sm:$0xff]
    %v306 = vld [vmem:[#allocation5 + $0x5b0] sm:$0xff]
    %v307 = vld [vmem:[#allocation5 + $0x5b8] sm:$0xff]
    %v308 = vld [vmem:[#allocation5 + $0x5c0] sm:$0xff]
    %v309 = vld [vmem:[#allocation5 + $0x5c8] sm:$0xff]
    %v310 = vld [vmem:[#allocation5 + $0x5d0] sm:$0xff]
    %v311 = vld [vmem:[#allocation5 + $0x5d8] sm:$0xff]
    %v312 = vld [vmem:[#allocation5 + $0x5e0] sm:$0xff]
    %v313 = vld [vmem:[#allocation5 + $0x5e8] sm:$0xff]
    %v314 = vld [vmem:[#allocation5 + $0x5f0] sm:$0xff]
    %v315 = vld [vmem:[#allocation5 + $0x5f8] sm:$0xff]
    %v316 = vld [vmem:[#allocation5 + $0x600] sm:$0xff]
    %v317 = vld [vmem:[#allocation5 + $0x608] sm:$0xff]
    %v318 = vld [vmem:[#allocation5 + $0x610] sm:$0xff]
    %v319 = vld [vmem:[#allocation5 + $0x618] sm:$0xff]
    %v320 = vld [vmem:[#allocation5 + $0x620] sm:$0xff]
    %v321 = vld [vmem:[#allocation5 + $0x628] sm:$0xff]
    %v322 = vld [vmem:[#allocation5 + $0x630] sm:$0xff]
    %v323 = vld [vmem:[#allocation5 + $0x638] sm:$0xff]
    %v324 = vld [vmem:[#allocation5 + $0x640] sm:$0xff]
    %v325 = vld [vmem:[#allocation5 + $0x648] sm:$0xff]
    %v326 = vld [vmem:[#allocation5 + $0x650] sm:$0xff]
    %v327 = vld [vmem:[#allocation5 + $0x658] sm:$0xff]
    %v328 = vld [vmem:[#allocation5 + $0x660] sm:$0xff]
    %v329 = vld [vmem:[#allocation5 + $0x668] sm:$0xff]
    %v330 = vld [vmem:[#allocation5 + $0x670] sm:$0xff]
    %v331 = vld [vmem:[#allocation5 + $0x678] sm:$0xff]
    %v332 = vld [vmem:[#allocation5 + $0x680] sm:$0xff]
    %v333 = vld [vmem:[#allocation5 + $0x688] sm:$0xff]
    %v334 = vld [vmem:[#allocation5 + $0x690] sm:$0xff]
    %v335 = vld [vmem:[#allocation5 + $0x698] sm:$0xff]
    %v336 = vld [vmem:[#allocation5 + $0x6a0] sm:$0xff]
    %v337 = vld [vmem:[#allocation5 + $0x6a8] sm:$0xff]
    %v338 = vld [vmem:[#allocation5 + $0x6b0] sm:$0xff]
    %v339 = vld [vmem:[#allocation5 + $0x6b8] sm:$0xff]
    %v340 = vld [vmem:[#allocation5 + $0x6c0] sm:$0xff]
    %v341 = vld [vmem:[#allocation5 + $0x6c8] sm:$0xff]
    %v342 = vld [vmem:[#allocation5 + $0x6d0] sm:$0xff]
    %v343 = vld [vmem:[#allocation5 + $0x6d8] sm:$0xff]
    %v344 = vld [vmem:[#allocation5 + $0x6e0] sm:$0xff]
    %v345 = vld [vmem:[#allocation5 + $0x6e8] sm:$0xff]
    %v346 = vld [vmem:[#allocation5 + $0x6f0] sm:$0xff]
    %v347 = vld [vmem:[#allocation5 + $0x6f8] sm:$0xff]
    %v348 = vld [vmem:[#allocation5 + $0x700] sm:$0xff]
    %v349 = vld [vmem:[#allocation5 + $0x708] sm:$0xff]
    %v350 = vld [vmem:[#allocation5 + $0x710] sm:$0xff]
    %v351 = vld [vmem:[#allocation5 + $0x718] sm:$0xff]
    %v352 = vld [vmem:[#allocation5 + $0x720] sm:$0xff]
    %v353 = vld [vmem:[#allocation5 + $0x728] sm:$0xff]
    %v354 = vld [vmem:[#allocation5 + $0x730] sm:$0xff]
    %v355 = vld [vmem:[#allocation5 + $0x738] sm:$0xff]
    %v356 = vld [vmem:[#allocation5 + $0x740] sm:$0xff]
    %v357 = vld [vmem:[#allocation5 + $0x748] sm:$0xff]
    %v358 = vld [vmem:[#allocation5 + $0x750] sm:$0xff]
    %v359 = vld [vmem:[#allocation5 + $0x758] sm:$0xff]
    %v360 = vld [vmem:[#allocation5 + $0x760] sm:$0xff]
    %v361 = vld [vmem:[#allocation5 + $0x768] sm:$0xff]
    %v362 = vld [vmem:[#allocation5 + $0x770] sm:$0xff]
    %v363 = vld [vmem:[#allocation5 + $0x778] sm:$0xff]
    %v364 = vld [vmem:[#allocation5 + $0x780] sm:$0xff]
    %v365 = vld [vmem:[#allocation5 + $0x788] sm:$0xff]
    %v366 = vld [vmem:[#allocation5 + $0x790] sm:$0xff]
    %v367 = vld [vmem:[#allocation5 + $0x798] sm:$0xff]
    %v368 = vld [vmem:[#allocation5 + $0x7a0] sm:$0xff]
    %v369 = vld [vmem:[#allocation5 + $0x7a8] sm:$0xff]
    %v370 = vld [vmem:[#allocation5 + $0x7b0] sm:$0xff]
    %v371 = vld [vmem:[#allocation5 + $0x7b8] sm:$0xff]
    %v372 = vld [vmem:[#allocation5 + $0x7c0] sm:$0xff]
    %v373 = vld [vmem:[#allocation5 + $0x7c8] sm:$0xff]
    %v374 = vld [vmem:[#allocation5 + $0x7d0] sm:$0xff]
    %v375 = vld [vmem:[#allocation5 + $0x7d8] sm:$0xff]
    %v376 = vld [vmem:[#allocation5 + $0x7e0] sm:$0xff]
    %v377 = vld [vmem:[#allocation5 + $0x7e8] sm:$0xff]
    %v378 = vld [vmem:[#allocation5 + $0x7f0] sm:$0xff]
    %v379 = vld [vmem:[#allocation5 + $0x7f8] sm:$0xff]
    %v380 = vld [vmem:[#allocation7] sm:$0xf]
    %v382 = vperm.slane %v380, 0
    %v383 = vperm.slane %v380, 1
    %v384 = vperm.slane %v380, 2
    %v385 = vperm.slane %v380, 3
    %v646 = vunpack.c.l.b16 %v124
    %v647 = vunpack.c.h.b16 %v124
    %v648 = vunpack.c.l.b16 %v125
    %v649 = vunpack.c.h.b16 %v125
    %v650 = vunpack.c.l.b16 %v126
    %v651 = vunpack.c.h.b16 %v126
    %v652 = vunpack.c.l.b16 %v127
    %v653 = vunpack.c.h.b16 %v127
    %v654 = vunpack.c.l.b16 %v128
    %v655 = vunpack.c.h.b16 %v128
    %v656 = vunpack.c.l.b16 %v129
    %v657 = vunpack.c.h.b16 %v129
    %v658 = vunpack.c.l.b16 %v130
    %v659 = vunpack.c.h.b16 %v130
    %v660 = vunpack.c.l.b16 %v131
    %v661 = vunpack.c.h.b16 %v131
    %v662 = vunpack.c.l.b16 %v132
    %v663 = vunpack.c.h.b16 %v132
    %v664 = vunpack.c.l.b16 %v133
    %v665 = vunpack.c.h.b16 %v133
    %v666 = vunpack.c.l.b16 %v134
    %v667 = vunpack.c.h.b16 %v134
    %v668 = vunpack.c.l.b16 %v135
    %v669 = vunpack.c.h.b16 %v135
    %v670 = vunpack.c.l.b16 %v136
    %v671 = vunpack.c.h.b16 %v136
    %v672 = vunpack.c.l.b16 %v137
    %v673 = vunpack.c.h.b16 %v137
    %v674 = vunpack.c.l.b16 %v138
    %v675 = vunpack.c.h.b16 %v138
    %v676 = vunpack.c.l.b16 %v139
    %v677 = vunpack.c.h.b16 %v139
    %v678 = vunpack.c.l.b16 %v140
    %v679 = vunpack.c.h.b16 %v140
    %v680 = vunpack.c.l.b16 %v141
    %v681 = vunpack.c.h.b16 %v141
    %v682 = vunpack.c.l.b16 %v142
    %v683 = vunpack.c.h.b16 %v142
    %v684 = vunpack.c.l.b16 %v143
    %v685 = vunpack.c.h.b16 %v143
    %v686 = vunpack.c.l.b16 %v144
    %v687 = vunpack.c.h.b16 %v144
    %v688 = vunpack.c.l.b16 %v145
    %v689 = vunpack.c.h.b16 %v145
    %v690 = vunpack.c.l.b16 %v146
    %v691 = vunpack.c.h.b16 %v146
    %v692 = vunpack.c.l.b16 %v147
    %v693 = vunpack.c.h.b16 %v147
    %v694 = vunpack.c.l.b16 %v148
    %v695 = vunpack.c.h.b16 %v148
    %v696 = vunpack.c.l.b16 %v149
    %v697 = vunpack.c.h.b16 %v149
    %v698 = vunpack.c.l.b16 %v150
    %v699 = vunpack.c.h.b16 %v150
    %v700 = vunpack.c.l.b16 %v151
    %v701 = vunpack.c.h.b16 %v151
    %v702 = vunpack.c.l.b16 %v152
    %v703 = vunpack.c.h.b16 %v152
    %v704 = vunpack.c.l.b16 %v153
    %v705 = vunpack.c.h.b16 %v153
    %v706 = vunpack.c.l.b16 %v154
    %v707 = vunpack.c.h.b16 %v154
    %v708 = vunpack.c.l.b16 %v155
    %v709 = vunpack.c.h.b16 %v155
    %v710 = vunpack.c.l.b16 %v156
    %v711 = vunpack.c.h.b16 %v156
    %v712 = vunpack.c.l.b16 %v157
    %v713 = vunpack.c.h.b16 %v157
    %v714 = vunpack.c.l.b16 %v158
    %v715 = vunpack.c.h.b16 %v158
    %v716 = vunpack.c.l.b16 %v159
    %v717 = vunpack.c.h.b16 %v159
    %v718 = vunpack.c.l.b16 %v160
    %v719 = vunpack.c.h.b16 %v160
    %v720 = vunpack.c.l.b16 %v161
    %v721 = vunpack.c.h.b16 %v161
    %v722 = vunpack.c.l.b16 %v162
    %v723 = vunpack.c.h.b16 %v162
    %v724 = vunpack.c.l.b16 %v163
    %v725 = vunpack.c.h.b16 %v163
    %v726 = vunpack.c.l.b16 %v164
    %v727 = vunpack.c.h.b16 %v164
    %v728 = vunpack.c.l.b16 %v165
    %v729 = vunpack.c.h.b16 %v165
    %v730 = vunpack.c.l.b16 %v166
    %v731 = vunpack.c.h.b16 %v166
    %v732 = vunpack.c.l.b16 %v167
    %v733 = vunpack.c.h.b16 %v167
    %v734 = vunpack.c.l.b16 %v168
    %v735 = vunpack.c.h.b16 %v168
    %v736 = vunpack.c.l.b16 %v169
    %v737 = vunpack.c.h.b16 %v169
    %v738 = vunpack.c.l.b16 %v170
    %v739 = vunpack.c.h.b16 %v170
    %v740 = vunpack.c.l.b16 %v171
    %v741 = vunpack.c.h.b16 %v171
    %v742 = vunpack.c.l.b16 %v172
    %v743 = vunpack.c.h.b16 %v172
    %v744 = vunpack.c.l.b16 %v173
    %v745 = vunpack.c.h.b16 %v173
    %v746 = vunpack.c.l.b16 %v174
    %v747 = vunpack.c.h.b16 %v174
    %v748 = vunpack.c.l.b16 %v175
    %v749 = vunpack.c.h.b16 %v175
    %v750 = vunpack.c.l.b16 %v176
    %v751 = vunpack.c.h.b16 %v176
    %v752 = vunpack.c.l.b16 %v177
    %v753 = vunpack.c.h.b16 %v177
    %v754 = vunpack.c.l.b16 %v178
    %v755 = vunpack.c.h.b16 %v178
    %v756 = vunpack.c.l.b16 %v179
    %v757 = vunpack.c.h.b16 %v179
    %v758 = vunpack.c.l.b16 %v180
    %v759 = vunpack.c.h.b16 %v180
    %v760 = vunpack.c.l.b16 %v181
    %v761 = vunpack.c.h.b16 %v181
    %v762 = vunpack.c.l.b16 %v182
    %v763 = vunpack.c.h.b16 %v182
    %v764 = vunpack.c.l.b16 %v183
    %v765 = vunpack.c.h.b16 %v183
    %v766 = vunpack.c.l.b16 %v184
    %v767 = vunpack.c.h.b16 %v184
    %v768 = vunpack.c.l.b16 %v185
    %v769 = vunpack.c.h.b16 %v185
    %v770 = vunpack.c.l.b16 %v186
    %v771 = vunpack.c.h.b16 %v186
    %v772 = vunpack.c.l.b16 %v187
    %v773 = vunpack.c.h.b16 %v187
    %v774 = vunpack.c.l.b16 %v188
    %v775 = vunpack.c.h.b16 %v188
    %v776 = vunpack.c.l.b16 %v189
    %v777 = vunpack.c.h.b16 %v189
    %v778 = vunpack.c.l.b16 %v190
    %v779 = vunpack.c.h.b16 %v190
    %v780 = vunpack.c.l.b16 %v191
    %v781 = vunpack.c.h.b16 %v191
    %v782 = vunpack.c.l.b16 %v192
    %v783 = vunpack.c.h.b16 %v192
    %v784 = vunpack.c.l.b16 %v193
    %v785 = vunpack.c.h.b16 %v193
    %v786 = vunpack.c.l.b16 %v194
    %v787 = vunpack.c.h.b16 %v194
    %v788 = vunpack.c.l.b16 %v195
    %v789 = vunpack.c.h.b16 %v195
    %v790 = vunpack.c.l.b16 %v196
    %v791 = vunpack.c.h.b16 %v196
    %v792 = vunpack.c.l.b16 %v197
    %v793 = vunpack.c.h.b16 %v197
    %v794 = vunpack.c.l.b16 %v198
    %v795 = vunpack.c.h.b16 %v198
    %v796 = vunpack.c.l.b16 %v199
    %v797 = vunpack.c.h.b16 %v199
    %v798 = vunpack.c.l.b16 %v200
    %v799 = vunpack.c.h.b16 %v200
    %v800 = vunpack.c.l.b16 %v201
    %v801 = vunpack.c.h.b16 %v201
    %v802 = vunpack.c.l.b16 %v202
    %v803 = vunpack.c.h.b16 %v202
    %v804 = vunpack.c.l.b16 %v203
    %v805 = vunpack.c.h.b16 %v203
    %v806 = vunpack.c.l.b16 %v204
    %v807 = vunpack.c.h.b16 %v204
    %v808 = vunpack.c.l.b16 %v205
    %v809 = vunpack.c.h.b16 %v205
    %v810 = vunpack.c.l.b16 %v206
    %v811 = vunpack.c.h.b16 %v206
    %v812 = vunpack.c.l.b16 %v207
    %v813 = vunpack.c.h.b16 %v207
    %v814 = vunpack.c.l.b16 %v208
    %v815 = vunpack.c.h.b16 %v208
    %v816 = vunpack.c.l.b16 %v209
    %v817 = vunpack.c.h.b16 %v209
    %v818 = vunpack.c.l.b16 %v210
    %v819 = vunpack.c.h.b16 %v210
    %v820 = vunpack.c.l.b16 %v211
    %v821 = vunpack.c.h.b16 %v211
    %v822 = vunpack.c.l.b16 %v212
    %v823 = vunpack.c.h.b16 %v212
    %v824 = vunpack.c.l.b16 %v213
    %v825 = vunpack.c.h.b16 %v213
    %v826 = vunpack.c.l.b16 %v214
    %v827 = vunpack.c.h.b16 %v214
    %v828 = vunpack.c.l.b16 %v215
    %v829 = vunpack.c.h.b16 %v215
    %v830 = vunpack.c.l.b16 %v216
    %v831 = vunpack.c.h.b16 %v216
    %v832 = vunpack.c.l.b16 %v217
    %v833 = vunpack.c.h.b16 %v217
    %v834 = vunpack.c.l.b16 %v218
    %v835 = vunpack.c.h.b16 %v218
    %v836 = vunpack.c.l.b16 %v219
    %v837 = vunpack.c.h.b16 %v219
    %v838 = vunpack.c.l.b16 %v220
    %v839 = vunpack.c.h.b16 %v220
    %v840 = vunpack.c.l.b16 %v221
    %v841 = vunpack.c.h.b16 %v221
    %v842 = vunpack.c.l.b16 %v222
    %v843 = vunpack.c.h.b16 %v222
    %v844 = vunpack.c.l.b16 %v223
    %v845 = vunpack.c.h.b16 %v223
    %v846 = vunpack.c.l.b16 %v224
    %v847 = vunpack.c.h.b16 %v224
    %v848 = vunpack.c.l.b16 %v225
    %v849 = vunpack.c.h.b16 %v225
    %v850 = vunpack.c.l.b16 %v226
    %v851 = vunpack.c.h.b16 %v226
    %v852 = vunpack.c.l.b16 %v227
    %v853 = vunpack.c.h.b16 %v227
    %v854 = vunpack.c.l.b16 %v228
    %v855 = vunpack.c.h.b16 %v228
    %v856 = vunpack.c.l.b16 %v229
    %v857 = vunpack.c.h.b16 %v229
    %v858 = vunpack.c.l.b16 %v230
    %v859 = vunpack.c.h.b16 %v230
    %v860 = vunpack.c.l.b16 %v231
    %v861 = vunpack.c.h.b16 %v231
    %v862 = vunpack.c.l.b16 %v232
    %v863 = vunpack.c.h.b16 %v232
    %v864 = vunpack.c.l.b16 %v233
    %v865 = vunpack.c.h.b16 %v233
    %v866 = vunpack.c.l.b16 %v234
    %v867 = vunpack.c.h.b16 %v234
    %v868 = vunpack.c.l.b16 %v235
    %v869 = vunpack.c.h.b16 %v235
    %v870 = vunpack.c.l.b16 %v236
    %v871 = vunpack.c.h.b16 %v236
    %v872 = vunpack.c.l.b16 %v237
    %v873 = vunpack.c.h.b16 %v237
    %v874 = vunpack.c.l.b16 %v238
    %v875 = vunpack.c.h.b16 %v238
    %v876 = vunpack.c.l.b16 %v239
    %v877 = vunpack.c.h.b16 %v239
    %v878 = vunpack.c.l.b16 %v240
    %v879 = vunpack.c.h.b16 %v240
    %v880 = vunpack.c.l.b16 %v241
    %v881 = vunpack.c.h.b16 %v241
    %v882 = vunpack.c.l.b16 %v242
    %v883 = vunpack.c.h.b16 %v242
    %v884 = vunpack.c.l.b16 %v243
    %v885 = vunpack.c.h.b16 %v243
    %v886 = vunpack.c.l.b16 %v244
    %v887 = vunpack.c.h.b16 %v244
    %v888 = vunpack.c.l.b16 %v245
    %v889 = vunpack.c.h.b16 %v245
    %v890 = vunpack.c.l.b16 %v246
    %v891 = vunpack.c.h.b16 %v246
    %v892 = vunpack.c.l.b16 %v247
    %v893 = vunpack.c.h.b16 %v247
    %v894 = vunpack.c.l.b16 %v248
    %v895 = vunpack.c.h.b16 %v248
    %v896 = vunpack.c.l.b16 %v249
    %v897 = vunpack.c.h.b16 %v249
    %v898 = vunpack.c.l.b16 %v250
    %v899 = vunpack.c.h.b16 %v250
    %v900 = vunpack.c.l.b16 %v251
    %v901 = vunpack.c.h.b16 %v251
    %v902 = vunpack.c.l.b16 %v252
    %v903 = vunpack.c.h.b16 %v252
    %v904 = vunpack.c.l.b16 %v253
    %v905 = vunpack.c.h.b16 %v253
    %v906 = vunpack.c.l.b16 %v254
    %v907 = vunpack.c.h.b16 %v254
    %v908 = vunpack.c.l.b16 %v255
    %v909 = vunpack.c.h.b16 %v255
    %v910 = vunpack.c.l.b16 %v256
    %v911 = vunpack.c.h.b16 %v256
    %v912 = vunpack.c.l.b16 %v257
    %v913 = vunpack.c.h.b16 %v257
    %v914 = vunpack.c.l.b16 %v258
    %v915 = vunpack.c.h.b16 %v258
    %v916 = vunpack.c.l.b16 %v259
    %v917 = vunpack.c.h.b16 %v259
    %v918 = vunpack.c.l.b16 %v260
    %v919 = vunpack.c.h.b16 %v260
    %v920 = vunpack.c.l.b16 %v261
    %v921 = vunpack.c.h.b16 %v261
    %v922 = vunpack.c.l.b16 %v262
    %v923 = vunpack.c.h.b16 %v262
    %v924 = vunpack.c.l.b16 %v263
    %v925 = vunpack.c.h.b16 %v263
    %v926 = vunpack.c.l.b16 %v264
    %v927 = vunpack.c.h.b16 %v264
    %v928 = vunpack.c.l.b16 %v265
    %v929 = vunpack.c.h.b16 %v265
    %v930 = vunpack.c.l.b16 %v266
    %v931 = vunpack.c.h.b16 %v266
    %v932 = vunpack.c.l.b16 %v267
    %v933 = vunpack.c.h.b16 %v267
    %v934 = vunpack.c.l.b16 %v268
    %v935 = vunpack.c.h.b16 %v268
    %v936 = vunpack.c.l.b16 %v269
    %v937 = vunpack.c.h.b16 %v269
    %v938 = vunpack.c.l.b16 %v270
    %v939 = vunpack.c.h.b16 %v270
    %v940 = vunpack.c.l.b16 %v271
    %v941 = vunpack.c.h.b16 %v271
    %v942 = vunpack.c.l.b16 %v272
    %v943 = vunpack.c.h.b16 %v272
    %v944 = vunpack.c.l.b16 %v273
    %v945 = vunpack.c.h.b16 %v273
    %v946 = vunpack.c.l.b16 %v274
    %v947 = vunpack.c.h.b16 %v274
    %v948 = vunpack.c.l.b16 %v275
    %v949 = vunpack.c.h.b16 %v275
    %v950 = vunpack.c.l.b16 %v276
    %v951 = vunpack.c.h.b16 %v276
    %v952 = vunpack.c.l.b16 %v277
    %v953 = vunpack.c.h.b16 %v277
    %v954 = vunpack.c.l.b16 %v278
    %v955 = vunpack.c.h.b16 %v278
    %v956 = vunpack.c.l.b16 %v279
    %v957 = vunpack.c.h.b16 %v279
    %v958 = vunpack.c.l.b16 %v280
    %v959 = vunpack.c.h.b16 %v280
    %v960 = vunpack.c.l.b16 %v281
    %v961 = vunpack.c.h.b16 %v281
    %v962 = vunpack.c.l.b16 %v282
    %v963 = vunpack.c.h.b16 %v282
    %v964 = vunpack.c.l.b16 %v283
    %v965 = vunpack.c.h.b16 %v283
    %v966 = vunpack.c.l.b16 %v284
    %v967 = vunpack.c.h.b16 %v284
    %v968 = vunpack.c.l.b16 %v285
    %v969 = vunpack.c.h.b16 %v285
    %v970 = vunpack.c.l.b16 %v286
    %v971 = vunpack.c.h.b16 %v286
    %v972 = vunpack.c.l.b16 %v287
    %v973 = vunpack.c.h.b16 %v287
    %v974 = vunpack.c.l.b16 %v288
    %v975 = vunpack.c.h.b16 %v288
    %v976 = vunpack.c.l.b16 %v289
    %v977 = vunpack.c.h.b16 %v289
    %v978 = vunpack.c.l.b16 %v290
    %v979 = vunpack.c.h.b16 %v290
    %v980 = vunpack.c.l.b16 %v291
    %v981 = vunpack.c.h.b16 %v291
    %v982 = vunpack.c.l.b16 %v292
    %v983 = vunpack.c.h.b16 %v292
    %v984 = vunpack.c.l.b16 %v293
    %v985 = vunpack.c.h.b16 %v293
    %v986 = vunpack.c.l.b16 %v294
    %v987 = vunpack.c.h.b16 %v294
    %v988 = vunpack.c.l.b16 %v295
    %v989 = vunpack.c.h.b16 %v295
    %v990 = vunpack.c.l.b16 %v296
    %v991 = vunpack.c.h.b16 %v296
    %v992 = vunpack.c.l.b16 %v297
    %v993 = vunpack.c.h.b16 %v297
    %v994 = vunpack.c.l.b16 %v298
    %v995 = vunpack.c.h.b16 %v298
    %v996 = vunpack.c.l.b16 %v299
    %v997 = vunpack.c.h.b16 %v299
    %v998 = vunpack.c.l.b16 %v300
    %v999 = vunpack.c.h.b16 %v300
    %v1000 = vunpack.c.l.b16 %v301
    %v1001 = vunpack.c.h.b16 %v301
    %v1002 = vunpack.c.l.b16 %v302
    %v1003 = vunpack.c.h.b16 %v302
    %v1004 = vunpack.c.l.b16 %v303
    %v1005 = vunpack.c.h.b16 %v303
    %v1006 = vunpack.c.l.b16 %v304
    %v1007 = vunpack.c.h.b16 %v304
    %v1008 = vunpack.c.l.b16 %v305
    %v1009 = vunpack.c.h.b16 %v305
    %v1010 = vunpack.c.l.b16 %v306
    %v1011 = vunpack.c.h.b16 %v306
    %v1012 = vunpack.c.l.b16 %v307
    %v1013 = vunpack.c.h.b16 %v307
    %v1014 = vunpack.c.l.b16 %v308
    %v1015 = vunpack.c.h.b16 %v308
    %v1016 = vunpack.c.l.b16 %v309
    %v1017 = vunpack.c.h.b16 %v309
    %v1018 = vunpack.c.l.b16 %v310
    %v1019 = vunpack.c.h.b16 %v310
    %v1020 = vunpack.c.l.b16 %v311
    %v1021 = vunpack.c.h.b16 %v311
    %v1022 = vunpack.c.l.b16 %v312
    %v1023 = vunpack.c.h.b16 %v312
    %v1024 = vunpack.c.l.b16 %v313
    %v1025 = vunpack.c.h.b16 %v313
    %v1026 = vunpack.c.l.b16 %v314
    %v1027 = vunpack.c.h.b16 %v314
    %v1028 = vunpack.c.l.b16 %v315
    %v1029 = vunpack.c.h.b16 %v315
    %v1030 = vunpack.c.l.b16 %v316
    %v1031 = vunpack.c.h.b16 %v316
    %v1032 = vunpack.c.l.b16 %v317
    %v1033 = vunpack.c.h.b16 %v317
    %v1034 = vunpack.c.l.b16 %v318
    %v1035 = vunpack.c.h.b16 %v318
    %v1036 = vunpack.c.l.b16 %v319
    %v1037 = vunpack.c.h.b16 %v319
    %v1038 = vunpack.c.l.b16 %v320
    %v1039 = vunpack.c.h.b16 %v320
    %v1040 = vunpack.c.l.b16 %v321
    %v1041 = vunpack.c.h.b16 %v321
    %v1042 = vunpack.c.l.b16 %v322
    %v1043 = vunpack.c.h.b16 %v322
    %v1044 = vunpack.c.l.b16 %v323
    %v1045 = vunpack.c.h.b16 %v323
    %v1046 = vunpack.c.l.b16 %v324
    %v1047 = vunpack.c.h.b16 %v324
    %v1048 = vunpack.c.l.b16 %v325
    %v1049 = vunpack.c.h.b16 %v325
    %v1050 = vunpack.c.l.b16 %v326
    %v1051 = vunpack.c.h.b16 %v326
    %v1052 = vunpack.c.l.b16 %v327
    %v1053 = vunpack.c.h.b16 %v327
    %v1054 = vunpack.c.l.b16 %v328
    %v1055 = vunpack.c.h.b16 %v328
    %v1056 = vunpack.c.l.b16 %v329
    %v1057 = vunpack.c.h.b16 %v329
    %v1058 = vunpack.c.l.b16 %v330
    %v1059 = vunpack.c.h.b16 %v330
    %v1060 = vunpack.c.l.b16 %v331
    %v1061 = vunpack.c.h.b16 %v331
    %v1062 = vunpack.c.l.b16 %v332
    %v1063 = vunpack.c.h.b16 %v332
    %v1064 = vunpack.c.l.b16 %v333
    %v1065 = vunpack.c.h.b16 %v333
    %v1066 = vunpack.c.l.b16 %v334
    %v1067 = vunpack.c.h.b16 %v334
    %v1068 = vunpack.c.l.b16 %v335
    %v1069 = vunpack.c.h.b16 %v335
    %v1070 = vunpack.c.l.b16 %v336
    %v1071 = vunpack.c.h.b16 %v336
    %v1072 = vunpack.c.l.b16 %v337
    %v1073 = vunpack.c.h.b16 %v337
    %v1074 = vunpack.c.l.b16 %v338
    %v1075 = vunpack.c.h.b16 %v338
    %v1076 = vunpack.c.l.b16 %v339
    %v1077 = vunpack.c.h.b16 %v339
    %v1078 = vunpack.c.l.b16 %v340
    %v1079 = vunpack.c.h.b16 %v340
    %v1080 = vunpack.c.l.b16 %v341
    %v1081 = vunpack.c.h.b16 %v341
    %v1082 = vunpack.c.l.b16 %v342
    %v1083 = vunpack.c.h.b16 %v342
    %v1084 = vunpack.c.l.b16 %v343
    %v1085 = vunpack.c.h.b16 %v343
    %v1086 = vunpack.c.l.b16 %v344
    %v1087 = vunpack.c.h.b16 %v344
    %v1088 = vunpack.c.l.b16 %v345
    %v1089 = vunpack.c.h.b16 %v345
    %v1090 = vunpack.c.l.b16 %v346
    %v1091 = vunpack.c.h.b16 %v346
    %v1092 = vunpack.c.l.b16 %v347
    %v1093 = vunpack.c.h.b16 %v347
    %v1094 = vunpack.c.l.b16 %v348
    %v1095 = vunpack.c.h.b16 %v348
    %v1096 = vunpack.c.l.b16 %v349
    %v1097 = vunpack.c.h.b16 %v349
    %v1098 = vunpack.c.l.b16 %v350
    %v1099 = vunpack.c.h.b16 %v350
    %v1100 = vunpack.c.l.b16 %v351
    %v1101 = vunpack.c.h.b16 %v351
    %v1102 = vunpack.c.l.b16 %v352
    %v1103 = vunpack.c.h.b16 %v352
    %v1104 = vunpack.c.l.b16 %v353
    %v1105 = vunpack.c.h.b16 %v353
    %v1106 = vunpack.c.l.b16 %v354
    %v1107 = vunpack.c.h.b16 %v354
    %v1108 = vunpack.c.l.b16 %v355
    %v1109 = vunpack.c.h.b16 %v355
    %v1110 = vunpack.c.l.b16 %v356
    %v1111 = vunpack.c.h.b16 %v356
    %v1112 = vunpack.c.l.b16 %v357
    %v1113 = vunpack.c.h.b16 %v357
    %v1114 = vunpack.c.l.b16 %v358
    %v1115 = vunpack.c.h.b16 %v358
    %v1116 = vunpack.c.l.b16 %v359
    %v1117 = vunpack.c.h.b16 %v359
    %v1118 = vunpack.c.l.b16 %v360
    %v1119 = vunpack.c.h.b16 %v360
    %v1120 = vunpack.c.l.b16 %v361
    %v1121 = vunpack.c.h.b16 %v361
    %v1122 = vunpack.c.l.b16 %v362
    %v1123 = vunpack.c.h.b16 %v362
    %v1124 = vunpack.c.l.b16 %v363
    %v1125 = vunpack.c.h.b16 %v363
    %v1126 = vunpack.c.l.b16 %v364
    %v1127 = vunpack.c.h.b16 %v364
    %v1128 = vunpack.c.l.b16 %v365
    %v1129 = vunpack.c.h.b16 %v365
    %v1130 = vunpack.c.l.b16 %v366
    %v1131 = vunpack.c.h.b16 %v366
    %v1132 = vunpack.c.l.b16 %v367
    %v1133 = vunpack.c.h.b16 %v367
    %v1134 = vunpack.c.l.b16 %v368
    %v1135 = vunpack.c.h.b16 %v368
    %v1136 = vunpack.c.l.b16 %v369
    %v1137 = vunpack.c.h.b16 %v369
    %v1138 = vunpack.c.l.b16 %v370
    %v1139 = vunpack.c.h.b16 %v370
    %v1140 = vunpack.c.l.b16 %v371
    %v1141 = vunpack.c.h.b16 %v371
    %v1142 = vunpack.c.l.b16 %v372
    %v1143 = vunpack.c.h.b16 %v372
    %v1144 = vunpack.c.l.b16 %v373
    %v1145 = vunpack.c.h.b16 %v373
    %v1146 = vunpack.c.l.b16 %v374
    %v1147 = vunpack.c.h.b16 %v374
    %v1148 = vunpack.c.l.b16 %v375
    %v1149 = vunpack.c.h.b16 %v375
    %v1150 = vunpack.c.l.b16 %v376
    %v1151 = vunpack.c.h.b16 %v376
    %v1152 = vunpack.c.l.b16 %v377
    %v1153 = vunpack.c.h.b16 %v377
    %v1154 = vunpack.c.l.b16 %v378
    %v1155 = vunpack.c.h.b16 %v378
    %v1156 = vunpack.c.l.b16 %v379
    %v1157 = vunpack.c.h.b16 %v379
    %v1158 = vpack.c.b16 %v650, %v646
    %v1159 = vpack.c.b16 %v651, %v647
    %v1160 = vpack.c.b16 %v652, %v648
    %v1161 = vpack.c.b16 %v653, %v649
    %v1162 = vpack.c.b16 %v658, %v654
    %v1163 = vpack.c.b16 %v659, %v655
    %v1164 = vpack.c.b16 %v660, %v656
    %v1165 = vpack.c.b16 %v661, %v657
    %v1166 = vpack.c.b16 %v666, %v662
    %v1167 = vpack.c.b16 %v667, %v663
    %v1168 = vpack.c.b16 %v668, %v664
    %v1169 = vpack.c.b16 %v669, %v665
    %v1170 = vpack.c.b16 %v674, %v670
    %v1171 = vpack.c.b16 %v675, %v671
    %v1172 = vpack.c.b16 %v676, %v672
    %v1173 = vpack.c.b16 %v677, %v673
    %v1174 = vpack.c.b16 %v682, %v678
    %v1175 = vpack.c.b16 %v683, %v679
    %v1176 = vpack.c.b16 %v684, %v680
    %v1177 = vpack.c.b16 %v685, %v681
    %v1178 = vpack.c.b16 %v690, %v686
    %v1179 = vpack.c.b16 %v691, %v687
    %v1180 = vpack.c.b16 %v692, %v688
    %v1181 = vpack.c.b16 %v693, %v689
    %v1182 = vpack.c.b16 %v698, %v694
    %v1183 = vpack.c.b16 %v699, %v695
    %v1184 = vpack.c.b16 %v700, %v696
    %v1185 = vpack.c.b16 %v701, %v697
    %v1186 = vpack.c.b16 %v706, %v702
    %v1187 = vpack.c.b16 %v707, %v703
    %v1188 = vpack.c.b16 %v708, %v704
    %v1189 = vpack.c.b16 %v709, %v705
    %v1190 = vpack.c.b16 %v714, %v710
    %v1191 = vpack.c.b16 %v715, %v711
    %v1192 = vpack.c.b16 %v716, %v712
    %v1193 = vpack.c.b16 %v717, %v713
    %v1194 = vpack.c.b16 %v722, %v718
    %v1195 = vpack.c.b16 %v723, %v719
    %v1196 = vpack.c.b16 %v724, %v720
    %v1197 = vpack.c.b16 %v725, %v721
    %v1198 = vpack.c.b16 %v730, %v726
    %v1199 = vpack.c.b16 %v731, %v727
    %v1200 = vpack.c.b16 %v732, %v728
    %v1201 = vpack.c.b16 %v733, %v729
    %v1202 = vpack.c.b16 %v738, %v734
    %v1203 = vpack.c.b16 %v739, %v735
    %v1204 = vpack.c.b16 %v740, %v736
    %v1205 = vpack.c.b16 %v741, %v737
    %v1206 = vpack.c.b16 %v746, %v742
    %v1207 = vpack.c.b16 %v747, %v743
    %v1208 = vpack.c.b16 %v748, %v744
    %v1209 = vpack.c.b16 %v749, %v745
    %v1210 = vpack.c.b16 %v754, %v750
    %v1211 = vpack.c.b16 %v755, %v751
    %v1212 = vpack.c.b16 %v756, %v752
    %v1213 = vpack.c.b16 %v757, %v753
    %v1214 = vpack.c.b16 %v762, %v758
    %v1215 = vpack.c.b16 %v763, %v759
    %v1216 = vpack.c.b16 %v764, %v760
    %v1217 = vpack.c.b16 %v765, %v761
    %v1218 = vpack.c.b16 %v770, %v766
    %v1219 = vpack.c.b16 %v771, %v767
    %v1220 = vpack.c.b16 %v772, %v768
    %v1221 = vpack.c.b16 %v773, %v769
    %v1222 = vpack.c.b16 %v778, %v774
    %v1223 = vpack.c.b16 %v779, %v775
    %v1224 = vpack.c.b16 %v780, %v776
    %v1225 = vpack.c.b16 %v781, %v777
    %v1226 = vpack.c.b16 %v786, %v782
    %v1227 = vpack.c.b16 %v787, %v783
    %v1228 = vpack.c.b16 %v788, %v784
    %v1229 = vpack.c.b16 %v789, %v785
    %v1230 = vpack.c.b16 %v794, %v790
    %v1231 = vpack.c.b16 %v795, %v791
    %v1232 = vpack.c.b16 %v796, %v792
    %v1233 = vpack.c.b16 %v797, %v793
    %v1234 = vpack.c.b16 %v802, %v798
    %v1235 = vpack.c.b16 %v803, %v799
    %v1236 = vpack.c.b16 %v804, %v800
    %v1237 = vpack.c.b16 %v805, %v801
    %v1238 = vpack.c.b16 %v810, %v806
    %v1239 = vpack.c.b16 %v811, %v807
    %v1240 = vpack.c.b16 %v812, %v808
    %v1241 = vpack.c.b16 %v813, %v809
    %v1242 = vpack.c.b16 %v818, %v814
    %v1243 = vpack.c.b16 %v819, %v815
    %v1244 = vpack.c.b16 %v820, %v816
    %v1245 = vpack.c.b16 %v821, %v817
    %v1246 = vpack.c.b16 %v826, %v822
    %v1247 = vpack.c.b16 %v827, %v823
    %v1248 = vpack.c.b16 %v828, %v824
    %v1249 = vpack.c.b16 %v829, %v825
    %v1250 = vpack.c.b16 %v834, %v830
    %v1251 = vpack.c.b16 %v835, %v831
    %v1252 = vpack.c.b16 %v836, %v832
    %v1253 = vpack.c.b16 %v837, %v833
    %v1254 = vpack.c.b16 %v842, %v838
    %v1255 = vpack.c.b16 %v843, %v839
    %v1256 = vpack.c.b16 %v844, %v840
    %v1257 = vpack.c.b16 %v845, %v841
    %v1258 = vpack.c.b16 %v850, %v846
    %v1259 = vpack.c.b16 %v851, %v847
    %v1260 = vpack.c.b16 %v852, %v848
    %v1261 = vpack.c.b16 %v853, %v849
    %v1262 = vpack.c.b16 %v858, %v854
    %v1263 = vpack.c.b16 %v859, %v855
    %v1264 = vpack.c.b16 %v860, %v856
    %v1265 = vpack.c.b16 %v861, %v857
    %v1266 = vpack.c.b16 %v866, %v862
    %v1267 = vpack.c.b16 %v867, %v863
    %v1268 = vpack.c.b16 %v868, %v864
    %v1269 = vpack.c.b16 %v869, %v865
    %v1270 = vpack.c.b16 %v874, %v870
    %v1271 = vpack.c.b16 %v875, %v871
    %v1272 = vpack.c.b16 %v876, %v872
    %v1273 = vpack.c.b16 %v877, %v873
    %v1274 = vpack.c.b16 %v882, %v878
    %v1275 = vpack.c.b16 %v883, %v879
    %v1276 = vpack.c.b16 %v884, %v880
    %v1277 = vpack.c.b16 %v885, %v881
    %v1278 = vpack.c.b16 %v890, %v886
    %v1279 = vpack.c.b16 %v891, %v887
    %v1280 = vpack.c.b16 %v892, %v888
    %v1281 = vpack.c.b16 %v893, %v889
    %v1282 = vpack.c.b16 %v898, %v894
    %v1283 = vpack.c.b16 %v899, %v895
    %v1284 = vpack.c.b16 %v900, %v896
    %v1285 = vpack.c.b16 %v901, %v897
    %v1286 = vpack.c.b16 %v906, %v902
    %v1287 = vpack.c.b16 %v907, %v903
    %v1288 = vpack.c.b16 %v908, %v904
    %v1289 = vpack.c.b16 %v909, %v905
    %v1290 = vpack.c.b16 %v914, %v910
    %v1291 = vpack.c.b16 %v915, %v911
    %v1292 = vpack.c.b16 %v916, %v912
    %v1293 = vpack.c.b16 %v917, %v913
    %v1294 = vpack.c.b16 %v922, %v918
    %v1295 = vpack.c.b16 %v923, %v919
    %v1296 = vpack.c.b16 %v924, %v920
    %v1297 = vpack.c.b16 %v925, %v921
    %v1298 = vpack.c.b16 %v930, %v926
    %v1299 = vpack.c.b16 %v931, %v927
    %v1300 = vpack.c.b16 %v932, %v928
    %v1301 = vpack.c.b16 %v933, %v929
    %v1302 = vpack.c.b16 %v938, %v934
    %v1303 = vpack.c.b16 %v939, %v935
    %v1304 = vpack.c.b16 %v940, %v936
    %v1305 = vpack.c.b16 %v941, %v937
    %v1306 = vpack.c.b16 %v946, %v942
    %v1307 = vpack.c.b16 %v947, %v943
    %v1308 = vpack.c.b16 %v948, %v944
    %v1309 = vpack.c.b16 %v949, %v945
    %v1310 = vpack.c.b16 %v954, %v950
    %v1311 = vpack.c.b16 %v955, %v951
    %v1312 = vpack.c.b16 %v956, %v952
    %v1313 = vpack.c.b16 %v957, %v953
    %v1314 = vpack.c.b16 %v962, %v958
    %v1315 = vpack.c.b16 %v963, %v959
    %v1316 = vpack.c.b16 %v964, %v960
    %v1317 = vpack.c.b16 %v965, %v961
    %v1318 = vpack.c.b16 %v970, %v966
    %v1319 = vpack.c.b16 %v971, %v967
    %v1320 = vpack.c.b16 %v972, %v968
    %v1321 = vpack.c.b16 %v973, %v969
    %v1322 = vpack.c.b16 %v978, %v974
    %v1323 = vpack.c.b16 %v979, %v975
    %v1324 = vpack.c.b16 %v980, %v976
    %v1325 = vpack.c.b16 %v981, %v977
    %v1326 = vpack.c.b16 %v986, %v982
    %v1327 = vpack.c.b16 %v987, %v983
    %v1328 = vpack.c.b16 %v988, %v984
    %v1329 = vpack.c.b16 %v989, %v985
    %v1330 = vpack.c.b16 %v994, %v990
    %v1331 = vpack.c.b16 %v995, %v991
    %v1332 = vpack.c.b16 %v996, %v992
    %v1333 = vpack.c.b16 %v997, %v993
    %v1334 = vpack.c.b16 %v1002, %v998
    %v1335 = vpack.c.b16 %v1003, %v999
    %v1336 = vpack.c.b16 %v1004, %v1000
    %v1337 = vpack.c.b16 %v1005, %v1001
    %v1338 = vpack.c.b16 %v1010, %v1006
    %v1339 = vpack.c.b16 %v1011, %v1007
    %v1340 = vpack.c.b16 %v1012, %v1008
    %v1341 = vpack.c.b16 %v1013, %v1009
    %v1342 = vpack.c.b16 %v1018, %v1014
    %v1343 = vpack.c.b16 %v1019, %v1015
    %v1344 = vpack.c.b16 %v1020, %v1016
    %v1345 = vpack.c.b16 %v1021, %v1017
    %v1346 = vpack.c.b16 %v1026, %v1022
    %v1347 = vpack.c.b16 %v1027, %v1023
    %v1348 = vpack.c.b16 %v1028, %v1024
    %v1349 = vpack.c.b16 %v1029, %v1025
    %v1350 = vpack.c.b16 %v1034, %v1030
    %v1351 = vpack.c.b16 %v1035, %v1031
    %v1352 = vpack.c.b16 %v1036, %v1032
    %v1353 = vpack.c.b16 %v1037, %v1033
    %v1354 = vpack.c.b16 %v1042, %v1038
    %v1355 = vpack.c.b16 %v1043, %v1039
    %v1356 = vpack.c.b16 %v1044, %v1040
    %v1357 = vpack.c.b16 %v1045, %v1041
    %v1358 = vpack.c.b16 %v1050, %v1046
    %v1359 = vpack.c.b16 %v1051, %v1047
    %v1360 = vpack.c.b16 %v1052, %v1048
    %v1361 = vpack.c.b16 %v1053, %v1049
    %v1362 = vpack.c.b16 %v1058, %v1054
    %v1363 = vpack.c.b16 %v1059, %v1055
    %v1364 = vpack.c.b16 %v1060, %v1056
    %v1365 = vpack.c.b16 %v1061, %v1057
    %v1366 = vpack.c.b16 %v1066, %v1062
    %v1367 = vpack.c.b16 %v1067, %v1063
    %v1368 = vpack.c.b16 %v1068, %v1064
    %v1369 = vpack.c.b16 %v1069, %v1065
    %v1370 = vpack.c.b16 %v1074, %v1070
    %v1371 = vpack.c.b16 %v1075, %v1071
    %v1372 = vpack.c.b16 %v1076, %v1072
    %v1373 = vpack.c.b16 %v1077, %v1073
    %v1374 = vpack.c.b16 %v1082, %v1078
    %v1375 = vpack.c.b16 %v1083, %v1079
    %v1376 = vpack.c.b16 %v1084, %v1080
    %v1377 = vpack.c.b16 %v1085, %v1081
    %v1378 = vpack.c.b16 %v1090, %v1086
    %v1379 = vpack.c.b16 %v1091, %v1087
    %v1380 = vpack.c.b16 %v1092, %v1088
    %v1381 = vpack.c.b16 %v1093, %v1089
    %v1382 = vpack.c.b16 %v1098, %v1094
    %v1383 = vpack.c.b16 %v1099, %v1095
    %v1384 = vpack.c.b16 %v1100, %v1096
    %v1385 = vpack.c.b16 %v1101, %v1097
    %v1386 = vpack.c.b16 %v1106, %v1102
    %v1387 = vpack.c.b16 %v1107, %v1103
    %v1388 = vpack.c.b16 %v1108, %v1104
    %v1389 = vpack.c.b16 %v1109, %v1105
    %v1390 = vpack.c.b16 %v1114, %v1110
    %v1391 = vpack.c.b16 %v1115, %v1111
    %v1392 = vpack.c.b16 %v1116, %v1112
    %v1393 = vpack.c.b16 %v1117, %v1113
    %v1394 = vpack.c.b16 %v1122, %v1118
    %v1395 = vpack.c.b16 %v1123, %v1119
    %v1396 = vpack.c.b16 %v1124, %v1120
    %v1397 = vpack.c.b16 %v1125, %v1121
    %v1398 = vpack.c.b16 %v1130, %v1126
    %v1399 = vpack.c.b16 %v1131, %v1127
    %v1400 = vpack.c.b16 %v1132, %v1128
    %v1401 = vpack.c.b16 %v1133, %v1129
    %v1402 = vpack.c.b16 %v1138, %v1134
    %v1403 = vpack.c.b16 %v1139, %v1135
    %v1404 = vpack.c.b16 %v1140, %v1136
    %v1405 = vpack.c.b16 %v1141, %v1137
    %v1406 = vpack.c.b16 %v1146, %v1142
    %v1407 = vpack.c.b16 %v1147, %v1143
    %v1408 = vpack.c.b16 %v1148, %v1144
    %v1409 = vpack.c.b16 %v1149, %v1145
    %v1410 = vpack.c.b16 %v1154, %v1150
    %v1411 = vpack.c.b16 %v1155, %v1151
    %v1412 = vpack.c.b16 %v1156, %v1152
    %v1413 = vpack.c.b16 %v1157, %v1153
    %1670 = vmatpush.bf16.msra.mxu0 %v1186
    %1671 = vmatpush.bf16.msra.mxu0 %v1182
    %1672 = vmatpush.bf16.msra.mxu0 %v1178
    %1673 = vmatpush.bf16.msra.mxu0 %v1174
    %1674 = vmatpush.bf16.msra.mxu0 %v1170
    %1675 = vmatpush.bf16.msra.mxu0 %v1166
    %1676 = vmatpush.bf16.msra.mxu0 %v1162
    %1677 = vmatpush.bf16.msra.mxu0 %v1158
    %1678 = vmatmul.bf16.gmra.mxu0 %v116
    %v1679 = vpop.f32.mrf.mxu0
    %v1680 = vadd.f32 %v382, %v1679
    %v1681 = vpop.f32.mrf.mxu0
    %1682 = vdwg.mxu0
    %1683 = vmatpush.bf16.msra.mxu0 %v1218
    %1684 = vmatpush.bf16.msra.mxu0 %v1214
    %1685 = vmatpush.bf16.msra.mxu0 %v1210
    %1686 = vmatpush.bf16.msra.mxu0 %v1206
    %1687 = vmatpush.bf16.msra.mxu0 %v1202
    %1688 = vmatpush.bf16.msra.mxu0 %v1198
    %1689 = vmatpush.bf16.msra.mxu0 %v1194
    %1690 = vmatpush.bf16.msra.mxu0 %v1190
    %1691 = vmatmul.bf16.gmra.mxu0 %v117
    %v1692 = vpop.f32.mrf.mxu0
    %v1693 = vadd.f32 %v1680, %v1692
    %v1694 = vpop.f32.mrf.mxu0
    %1695 = vdwg.mxu0
    %1696 = vmatpush.bf16.msra.mxu0 %v1250
    %1697 = vmatpush.bf16.msra.mxu0 %v1246
    %1698 = vmatpush.bf16.msra.mxu0 %v1242
    %1699 = vmatpush.bf16.msra.mxu0 %v1238
    %1700 = vmatpush.bf16.msra.mxu0 %v1234
    %1701 = vmatpush.bf16.msra.mxu0 %v1230
    %1702 = vmatpush.bf16.msra.mxu0 %v1226
    %1703 = vmatpush.bf16.msra.mxu0 %v1222
    %1704 = vmatmul.bf16.gmra.mxu0 %v118
    %v1705 = vpop.f32.mrf.mxu0
    %v1706 = vadd.f32 %v1693, %v1705
    %v1707 = vpop.f32.mrf.mxu0
    %1708 = vdwg.mxu0
    %1709 = vmatpush.bf16.msra.mxu0 %v1282
    %1710 = vmatpush.bf16.msra.mxu0 %v1278
    %1711 = vmatpush.bf16.msra.mxu0 %v1274
    %1712 = vmatpush.bf16.msra.mxu0 %v1270
    %1713 = vmatpush.bf16.msra.mxu0 %v1266
    %1714 = vmatpush.bf16.msra.mxu0 %v1262
    %1715 = vmatpush.bf16.msra.mxu0 %v1258
    %1716 = vmatpush.bf16.msra.mxu0 %v1254
    %1717 = vmatmul.bf16.gmra.mxu0 %v119
    %v1718 = vpop.f32.mrf.mxu0
    %v1719 = vadd.f32 %v1706, %v1718
    %v1720 = vpop.f32.mrf.mxu0
    %1721 = vdwg.mxu0
    %1722 = vmatpush.bf16.msra.mxu0 %v1314
    %1723 = vmatpush.bf16.msra.mxu0 %v1310
    %1724 = vmatpush.bf16.msra.mxu0 %v1306
    %1725 = vmatpush.bf16.msra.mxu0 %v1302
    %1726 = vmatpush.bf16.msra.mxu0 %v1298
    %1727 = vmatpush.bf16.msra.mxu0 %v1294
    %1728 = vmatpush.bf16.msra.mxu0 %v1290
    %1729 = vmatpush.bf16.msra.mxu0 %v1286
    %1730 = vmatmul.bf16.gmra.mxu0 %v120
    %v1731 = vpop.f32.mrf.mxu0
    %v1732 = vadd.f32 %v1719, %v1731
    %v1733 = vpop.f32.mrf.mxu0
    %1734 = vdwg.mxu0
    %1735 = vmatpush.bf16.msra.mxu0 %v1346
    %1736 = vmatpush.bf16.msra.mxu0 %v1342
    %1737 = vmatpush.bf16.msra.mxu0 %v1338
    %1738 = vmatpush.bf16.msra.mxu0 %v1334
    %1739 = vmatpush.bf16.msra.mxu0 %v1330
    %1740 = vmatpush.bf16.msra.mxu0 %v1326
    %1741 = vmatpush.bf16.msra.mxu0 %v1322
    %1742 = vmatpush.bf16.msra.mxu0 %v1318
    %1743 = vmatmul.bf16.gmra.mxu0 %v121
    %v1744 = vpop.f32.mrf.mxu0
    %v1745 = vadd.f32 %v1732, %v1744
    %v1746 = vpop.f32.mrf.mxu0
    %1747 = vdwg.mxu0
    %1748 = vmatpush.bf16.msra.mxu0 %v1378
    %1749 = vmatpush.bf16.msra.mxu0 %v1374
    %1750 = vmatpush.bf16.msra.mxu0 %v1370
    %1751 = vmatpush.bf16.msra.mxu0 %v1366
    %1752 = vmatpush.bf16.msra.mxu0 %v1362
    %1753 = vmatpush.bf16.msra.mxu0 %v1358
    %1754 = vmatpush.bf16.msra.mxu0 %v1354
    %1755 = vmatpush.bf16.msra.mxu0 %v1350
    %1756 = vmatmul.bf16.gmra.mxu0 %v122
    %v1757 = vpop.f32.mrf.mxu0
    %v1758 = vadd.f32 %v1745, %v1757
    %v1759 = vpop.f32.mrf.mxu0
    %1760 = vdwg.mxu0
    %1761 = vmatpush.bf16.msra.mxu0 %v1410
    %1762 = vmatpush.bf16.msra.mxu0 %v1406
    %1763 = vmatpush.bf16.msra.mxu0 %v1402
    %1764 = vmatpush.bf16.msra.mxu0 %v1398
    %1765 = vmatpush.bf16.msra.mxu0 %v1394
    %1766 = vmatpush.bf16.msra.mxu0 %v1390
    %1767 = vmatpush.bf16.msra.mxu0 %v1386
    %1768 = vmatpush.bf16.msra.mxu0 %v1382
    %1769 = vmatmul.bf16.gmra.mxu0 %v123
    %v1770 = vpop.f32.mrf.mxu0
    %v1771 = vadd.f32 %v1758, %v1770
    %v1772 = vpop.f32.mrf.mxu0
    %1773 = vdwg.mxu0
    %1774 = vmatpush.bf16.msra.mxu0 %v1187
    %1775 = vmatpush.bf16.msra.mxu0 %v1183
    %1776 = vmatpush.bf16.msra.mxu0 %v1179
    %1777 = vmatpush.bf16.msra.mxu0 %v1175
    %1778 = vmatpush.bf16.msra.mxu0 %v1171
    %1779 = vmatpush.bf16.msra.mxu0 %v1167
    %1780 = vmatpush.bf16.msra.mxu0 %v1163
    %1781 = vmatpush.bf16.msra.mxu0 %v1159
    %1782 = vmatmul.bf16.gmra.mxu0 %v116
    %v1783 = vpop.f32.mrf.mxu0
    %v1784 = vadd.f32 %v383, %v1783
    %v1785 = vpop.f32.mrf.mxu0
    %1786 = vdwg.mxu0
    %1787 = vmatpush.bf16.msra.mxu0 %v1219
    %1788 = vmatpush.bf16.msra.mxu0 %v1215
    %1789 = vmatpush.bf16.msra.mxu0 %v1211
    %1790 = vmatpush.bf16.msra.mxu0 %v1207
    %1791 = vmatpush.bf16.msra.mxu0 %v1203
    %1792 = vmatpush.bf16.msra.mxu0 %v1199
    %1793 = vmatpush.bf16.msra.mxu0 %v1195
    %1794 = vmatpush.bf16.msra.mxu0 %v1191
    %1795 = vmatmul.bf16.gmra.mxu0 %v117
    %v1796 = vpop.f32.mrf.mxu0
    %v1797 = vadd.f32 %v1784, %v1796
    %v1798 = vpop.f32.mrf.mxu0
    %1799 = vdwg.mxu0
    %1800 = vmatpush.bf16.msra.mxu0 %v1251
    %1801 = vmatpush.bf16.msra.mxu0 %v1247
    %1802 = vmatpush.bf16.msra.mxu0 %v1243
    %1803 = vmatpush.bf16.msra.mxu0 %v1239
    %1804 = vmatpush.bf16.msra.mxu0 %v1235
    %1805 = vmatpush.bf16.msra.mxu0 %v1231
    %1806 = vmatpush.bf16.msra.mxu0 %v1227
    %1807 = vmatpush.bf16.msra.mxu0 %v1223
    %1808 = vmatmul.bf16.gmra.mxu0 %v118
    %v1809 = vpop.f32.mrf.mxu0
    %v1810 = vadd.f32 %v1797, %v1809
    %v1811 = vpop.f32.mrf.mxu0
    %1812 = vdwg.mxu0
    %1813 = vmatpush.bf16.msra.mxu0 %v1283
    %1814 = vmatpush.bf16.msra.mxu0 %v1279
    %1815 = vmatpush.bf16.msra.mxu0 %v1275
    %1816 = vmatpush.bf16.msra.mxu0 %v1271
    %1817 = vmatpush.bf16.msra.mxu0 %v1267
    %1818 = vmatpush.bf16.msra.mxu0 %v1263
    %1819 = vmatpush.bf16.msra.mxu0 %v1259
    %1820 = vmatpush.bf16.msra.mxu0 %v1255
    %1821 = vmatmul.bf16.gmra.mxu0 %v119
    %v1822 = vpop.f32.mrf.mxu0
    %v1823 = vadd.f32 %v1810, %v1822
    %v1824 = vpop.f32.mrf.mxu0
    %1825 = vdwg.mxu0
    %1826 = vmatpush.bf16.msra.mxu0 %v1315
    %1827 = vmatpush.bf16.msra.mxu0 %v1311
    %1828 = vmatpush.bf16.msra.mxu0 %v1307
    %1829 = vmatpush.bf16.msra.mxu0 %v1303
    %1830 = vmatpush.bf16.msra.mxu0 %v1299
    %1831 = vmatpush.bf16.msra.mxu0 %v1295
    %1832 = vmatpush.bf16.msra.mxu0 %v1291
    %1833 = vmatpush.bf16.msra.mxu0 %v1287
    %1834 = vmatmul.bf16.gmra.mxu0 %v120
    %v1835 = vpop.f32.mrf.mxu0
    %v1836 = vadd.f32 %v1823, %v1835
    %v1837 = vpop.f32.mrf.mxu0
    %1838 = vdwg.mxu0
    %1839 = vmatpush.bf16.msra.mxu0 %v1347
    %1840 = vmatpush.bf16.msra.mxu0 %v1343
    %1841 = vmatpush.bf16.msra.mxu0 %v1339
    %1842 = vmatpush.bf16.msra.mxu0 %v1335
    %1843 = vmatpush.bf16.msra.mxu0 %v1331
    %1844 = vmatpush.bf16.msra.mxu0 %v1327
    %1845 = vmatpush.bf16.msra.mxu0 %v1323
    %1846 = vmatpush.bf16.msra.mxu0 %v1319
    %1847 = vmatmul.bf16.gmra.mxu0 %v121
    %v1848 = vpop.f32.mrf.mxu0
    %v1849 = vadd.f32 %v1836, %v1848
    %v1850 = vpop.f32.mrf.mxu0
    %1851 = vdwg.mxu0
    %1852 = vmatpush.bf16.msra.mxu0 %v1379
    %1853 = vmatpush.bf16.msra.mxu0 %v1375
    %1854 = vmatpush.bf16.msra.mxu0 %v1371
    %1855 = vmatpush.bf16.msra.mxu0 %v1367
    %1856 = vmatpush.bf16.msra.mxu0 %v1363
    %1857 = vmatpush.bf16.msra.mxu0 %v1359
    %1858 = vmatpush.bf16.msra.mxu0 %v1355
    %1859 = vmatpush.bf16.msra.mxu0 %v1351
    %1860 = vmatmul.bf16.gmra.mxu0 %v122
    %v1861 = vpop.f32.mrf.mxu0
    %v1862 = vadd.f32 %v1849, %v1861
    %v1863 = vpop.f32.mrf.mxu0
    %1864 = vdwg.mxu0
    %1865 = vmatpush.bf16.msra.mxu0 %v1411
    %1866 = vmatpush.bf16.msra.mxu0 %v1407
    %1867 = vmatpush.bf16.msra.mxu0 %v1403
    %1868 = vmatpush.bf16.msra.mxu0 %v1399
    %1869 = vmatpush.bf16.msra.mxu0 %v1395
    %1870 = vmatpush.bf16.msra.mxu0 %v1391
    %1871 = vmatpush.bf16.msra.mxu0 %v1387
    %1872 = vmatpush.bf16.msra.mxu0 %v1383
    %1873 = vmatmul.bf16.gmra.mxu0 %v123
    %v1874 = vpop.f32.mrf.mxu0
    %v1875 = vadd.f32 %v1862, %v1874
    %v1876 = vpop.f32.mrf.mxu0
    %1877 = vdwg.mxu0
    %1878 = vmatpush.bf16.msra.mxu0 %v1188
    %1879 = vmatpush.bf16.msra.mxu0 %v1184
    %1880 = vmatpush.bf16.msra.mxu0 %v1180
    %1881 = vmatpush.bf16.msra.mxu0 %v1176
    %1882 = vmatpush.bf16.msra.mxu0 %v1172
    %1883 = vmatpush.bf16.msra.mxu0 %v1168
    %1884 = vmatpush.bf16.msra.mxu0 %v1164
    %1885 = vmatpush.bf16.msra.mxu0 %v1160
    %1886 = vmatmul.bf16.gmra.mxu0 %v116
    %v1887 = vpop.f32.mrf.mxu0
    %v1888 = vadd.f32 %v384, %v1887
    %v1889 = vpop.f32.mrf.mxu0
    %1890 = vdwg.mxu0
    %1891 = vmatpush.bf16.msra.mxu0 %v1220
    %1892 = vmatpush.bf16.msra.mxu0 %v1216
    %1893 = vmatpush.bf16.msra.mxu0 %v1212
    %1894 = vmatpush.bf16.msra.mxu0 %v1208
    %1895 = vmatpush.bf16.msra.mxu0 %v1204
    %1896 = vmatpush.bf16.msra.mxu0 %v1200
    %1897 = vmatpush.bf16.msra.mxu0 %v1196
    %1898 = vmatpush.bf16.msra.mxu0 %v1192
    %1899 = vmatmul.bf16.gmra.mxu0 %v117
    %v1900 = vpop.f32.mrf.mxu0
    %v1901 = vadd.f32 %v1888, %v1900
    %v1902 = vpop.f32.mrf.mxu0
    %1903 = vdwg.mxu0
    %1904 = vmatpush.bf16.msra.mxu0 %v1252
    %1905 = vmatpush.bf16.msra.mxu0 %v1248
    %1906 = vmatpush.bf16.msra.mxu0 %v1244
    %1907 = vmatpush.bf16.msra.mxu0 %v1240
    %1908 = vmatpush.bf16.msra.mxu0 %v1236
    %1909 = vmatpush.bf16.msra.mxu0 %v1232
    %1910 = vmatpush.bf16.msra.mxu0 %v1228
    %1911 = vmatpush.bf16.msra.mxu0 %v1224
    %1912 = vmatmul.bf16.gmra.mxu0 %v118
    %v1913 = vpop.f32.mrf.mxu0
    %v1914 = vadd.f32 %v1901, %v1913
    %v1915 = vpop.f32.mrf.mxu0
    %1916 = vdwg.mxu0
    %1917 = vmatpush.bf16.msra.mxu0 %v1284
    %1918 = vmatpush.bf16.msra.mxu0 %v1280
    %1919 = vmatpush.bf16.msra.mxu0 %v1276
    %1920 = vmatpush.bf16.msra.mxu0 %v1272
    %1921 = vmatpush.bf16.msra.mxu0 %v1268
    %1922 = vmatpush.bf16.msra.mxu0 %v1264
    %1923 = vmatpush.bf16.msra.mxu0 %v1260
    %1924 = vmatpush.bf16.msra.mxu0 %v1256
    %1925 = vmatmul.bf16.gmra.mxu0 %v119
    %v1926 = vpop.f32.mrf.mxu0
    %v1927 = vadd.f32 %v1914, %v1926
    %v1928 = vpop.f32.mrf.mxu0
    %1929 = vdwg.mxu0
    %1930 = vmatpush.bf16.msra.mxu0 %v1316
    %1931 = vmatpush.bf16.msra.mxu0 %v1312
    %1932 = vmatpush.bf16.msra.mxu0 %v1308
    %1933 = vmatpush.bf16.msra.mxu0 %v1304
    %1934 = vmatpush.bf16.msra.mxu0 %v1300
    %1935 = vmatpush.bf16.msra.mxu0 %v1296
    %1936 = vmatpush.bf16.msra.mxu0 %v1292
    %1937 = vmatpush.bf16.msra.mxu0 %v1288
    %1938 = vmatmul.bf16.gmra.mxu0 %v120
    %v1939 = vpop.f32.mrf.mxu0
    %v1940 = vadd.f32 %v1927, %v1939
    %v1941 = vpop.f32.mrf.mxu0
    %1942 = vdwg.mxu0
    %1943 = vmatpush.bf16.msra.mxu0 %v1348
    %1944 = vmatpush.bf16.msra.mxu0 %v1344
    %1945 = vmatpush.bf16.msra.mxu0 %v1340
    %1946 = vmatpush.bf16.msra.mxu0 %v1336
    %1947 = vmatpush.bf16.msra.mxu0 %v1332
    %1948 = vmatpush.bf16.msra.mxu0 %v1328
    %1949 = vmatpush.bf16.msra.mxu0 %v1324
    %1950 = vmatpush.bf16.msra.mxu0 %v1320
    %1951 = vmatmul.bf16.gmra.mxu0 %v121
    %v1952 = vpop.f32.mrf.mxu0
    %v1953 = vadd.f32 %v1940, %v1952
    %v1954 = vpop.f32.mrf.mxu0
    %1955 = vdwg.mxu0
    %1956 = vmatpush.bf16.msra.mxu0 %v1380
    %1957 = vmatpush.bf16.msra.mxu0 %v1376
    %1958 = vmatpush.bf16.msra.mxu0 %v1372
    %1959 = vmatpush.bf16.msra.mxu0 %v1368
    %1960 = vmatpush.bf16.msra.mxu0 %v1364
    %1961 = vmatpush.bf16.msra.mxu0 %v1360
    %1962 = vmatpush.bf16.msra.mxu0 %v1356
    %1963 = vmatpush.bf16.msra.mxu0 %v1352
    %1964 = vmatmul.bf16.gmra.mxu0 %v122
    %v1965 = vpop.f32.mrf.mxu0
    %v1966 = vadd.f32 %v1953, %v1965
    %v1967 = vpop.f32.mrf.mxu0
    %1968 = vdwg.mxu0
    %1969 = vmatpush.bf16.msra.mxu0 %v1412
    %1970 = vmatpush.bf16.msra.mxu0 %v1408
    %1971 = vmatpush.bf16.msra.mxu0 %v1404
    %1972 = vmatpush.bf16.msra.mxu0 %v1400
    %1973 = vmatpush.bf16.msra.mxu0 %v1396
    %1974 = vmatpush.bf16.msra.mxu0 %v1392
    %1975 = vmatpush.bf16.msra.mxu0 %v1388
    %1976 = vmatpush.bf16.msra.mxu0 %v1384
    %1977 = vmatmul.bf16.gmra.mxu0 %v123
    %v1978 = vpop.f32.mrf.mxu0
    %v1979 = vadd.f32 %v1966, %v1978
    %v1980 = vpop.f32.mrf.mxu0
    %1981 = vdwg.mxu0
    %1982 = vmatpush.bf16.msra.mxu0 %v1189
    %1983 = vmatpush.bf16.msra.mxu0 %v1185
    %1984 = vmatpush.bf16.msra.mxu0 %v1181
    %1985 = vmatpush.bf16.msra.mxu0 %v1177
    %1986 = vmatpush.bf16.msra.mxu0 %v1173
    %1987 = vmatpush.bf16.msra.mxu0 %v1169
    %1988 = vmatpush.bf16.msra.mxu0 %v1165
    %1989 = vmatpush.bf16.msra.mxu0 %v1161
    %1990 = vmatmul.bf16.gmra.mxu0 %v116
    %v1991 = vpop.f32.mrf.mxu0
    %v1992 = vadd.f32 %v385, %v1991
    %v1993 = vpop.f32.mrf.mxu0
    %1994 = vdwg.mxu0
    %1995 = vmatpush.bf16.msra.mxu0 %v1221
    %1996 = vmatpush.bf16.msra.mxu0 %v1217
    %1997 = vmatpush.bf16.msra.mxu0 %v1213
    %1998 = vmatpush.bf16.msra.mxu0 %v1209
    %1999 = vmatpush.bf16.msra.mxu0 %v1205
    %2000 = vmatpush.bf16.msra.mxu0 %v1201
    %2001 = vmatpush.bf16.msra.mxu0 %v1197
    %2002 = vmatpush.bf16.msra.mxu0 %v1193
    %2003 = vmatmul.bf16.gmra.mxu0 %v117
    %v2004 = vpop.f32.mrf.mxu0
    %v2005 = vadd.f32 %v1992, %v2004
    %v2006 = vpop.f32.mrf.mxu0
    %2007 = vdwg.mxu0
    %2008 = vmatpush.bf16.msra.mxu0 %v1253
    %2009 = vmatpush.bf16.msra.mxu0 %v1249
    %2010 = vmatpush.bf16.msra.mxu0 %v1245
    %2011 = vmatpush.bf16.msra.mxu0 %v1241
    %2012 = vmatpush.bf16.msra.mxu0 %v1237
    %2013 = vmatpush.bf16.msra.mxu0 %v1233
    %2014 = vmatpush.bf16.msra.mxu0 %v1229
    %2015 = vmatpush.bf16.msra.mxu0 %v1225
    %2016 = vmatmul.bf16.gmra.mxu0 %v118
    %v2017 = vpop.f32.mrf.mxu0
    %v2018 = vadd.f32 %v2005, %v2017
    %v2019 = vpop.f32.mrf.mxu0
    %2020 = vdwg.mxu0
    %2021 = vmatpush.bf16.msra.mxu0 %v1285
    %2022 = vmatpush.bf16.msra.mxu0 %v1281
    %2023 = vmatpush.bf16.msra.mxu0 %v1277
    %2024 = vmatpush.bf16.msra.mxu0 %v1273
    %2025 = vmatpush.bf16.msra.mxu0 %v1269
    %2026 = vmatpush.bf16.msra.mxu0 %v1265
    %2027 = vmatpush.bf16.msra.mxu0 %v1261
    %2028 = vmatpush.bf16.msra.mxu0 %v1257
    %2029 = vmatmul.bf16.gmra.mxu0 %v119
    %v2030 = vpop.f32.mrf.mxu0
    %v2031 = vadd.f32 %v2018, %v2030
    %v2032 = vpop.f32.mrf.mxu0
    %2033 = vdwg.mxu0
    %2034 = vmatpush.bf16.msra.mxu0 %v1317
    %2035 = vmatpush.bf16.msra.mxu0 %v1313
    %2036 = vmatpush.bf16.msra.mxu0 %v1309
    %2037 = vmatpush.bf16.msra.mxu0 %v1305
    %2038 = vmatpush.bf16.msra.mxu0 %v1301
    %2039 = vmatpush.bf16.msra.mxu0 %v1297
    %2040 = vmatpush.bf16.msra.mxu0 %v1293
    %2041 = vmatpush.bf16.msra.mxu0 %v1289
    %2042 = vmatmul.bf16.gmra.mxu0 %v120
    %v2043 = vpop.f32.mrf.mxu0
    %v2044 = vadd.f32 %v2031, %v2043
    %v2045 = vpop.f32.mrf.mxu0
    %2046 = vdwg.mxu0
    %2047 = vmatpush.bf16.msra.mxu0 %v1349
    %2048 = vmatpush.bf16.msra.mxu0 %v1345
    %2049 = vmatpush.bf16.msra.mxu0 %v1341
    %2050 = vmatpush.bf16.msra.mxu0 %v1337
    %2051 = vmatpush.bf16.msra.mxu0 %v1333
    %2052 = vmatpush.bf16.msra.mxu0 %v1329
    %2053 = vmatpush.bf16.msra.mxu0 %v1325
    %2054 = vmatpush.bf16.msra.mxu0 %v1321
    %2055 = vmatmul.bf16.gmra.mxu0 %v121
    %v2056 = vpop.f32.mrf.mxu0
    %v2057 = vadd.f32 %v2044, %v2056
    %v2058 = vpop.f32.mrf.mxu0
    %2059 = vdwg.mxu0
    %2060 = vmatpush.bf16.msra.mxu0 %v1381
    %2061 = vmatpush.bf16.msra.mxu0 %v1377
    %2062 = vmatpush.bf16.msra.mxu0 %v1373
    %2063 = vmatpush.bf16.msra.mxu0 %v1369
    %2064 = vmatpush.bf16.msra.mxu0 %v1365
    %2065 = vmatpush.bf16.msra.mxu0 %v1361
    %2066 = vmatpush.bf16.msra.mxu0 %v1357
    %2067 = vmatpush.bf16.msra.mxu0 %v1353
    %2068 = vmatmul.bf16.gmra.mxu0 %v122
    %v2069 = vpop.f32.mrf.mxu0
    %v2070 = vadd.f32 %v2057, %v2069
    %v2071 = vpop.f32.mrf.mxu0
    %2072 = vdwg.mxu0
    %2073 = vmatpush.bf16.msra.mxu0 %v1413
    %2074 = vmatpush.bf16.msra.mxu0 %v1409
    %2075 = vmatpush.bf16.msra.mxu0 %v1405
    %2076 = vmatpush.bf16.msra.mxu0 %v1401
    %2077 = vmatpush.bf16.msra.mxu0 %v1397
    %2078 = vmatpush.bf16.msra.mxu0 %v1393
    %2079 = vmatpush.bf16.msra.mxu0 %v1389
    %2080 = vmatpush.bf16.msra.mxu0 %v1385
    %2081 = vmatmul.bf16.gmra.mxu0 %v123
    %v2082 = vpop.f32.mrf.mxu0
    %v2083 = vadd.f32 %v2070, %v2082
    %v2084 = vpop.f32.mrf.mxu0
    %2085 = vdwg.mxu0
    %v2086 = vmax.f32 %v1771, 0.0
    %v2087 = vmax.f32 %v1875, 0.0
    %v2088 = vmax.f32 %v1979, 0.0
    %v2089 = vmax.f32 %v2083, 0.0
    %v2090 = vpack.c.bf16 %v2086, %v2086
    %v2091 = vpack.c.bf16 %v2087, %v2087
    %v2092 = vpack.c.bf16 %v2088, %v2088
    %v2093 = vpack.c.bf16 %v2089, %v2089
    %v2094 = vld [vmem:[#allocation8] sm:$0xf]
    %v2095 = vld [vmem:[#allocation8 + $0x4] sm:$0xf]
    %v2096 = vld [vmem:[#allocation8 + $0x8] sm:$0xf]
    %v2097 = vld [vmem:[#allocation8 + $0xc] sm:$0xf]
    %v2098 = vld [vmem:[#allocation8 + $0x10] sm:$0xf]
    %v2099 = vld [vmem:[#allocation8 + $0x14] sm:$0xf]
    %v2100 = vld [vmem:[#allocation8 + $0x18] sm:$0xf]
    %v2101 = vld [vmem:[#allocation8 + $0x1c] sm:$0xf]
    %v2102 = vld [vmem:[#allocation8 + $0x20] sm:$0xf]
    %v2103 = vld [vmem:[#allocation8 + $0x24] sm:$0xf]
    %v2104 = vld [vmem:[#allocation8 + $0x28] sm:$0xf]
    %v2105 = vld [vmem:[#allocation8 + $0x2c] sm:$0xf]
    %v2106 = vld [vmem:[#allocation8 + $0x30] sm:$0xf]
    %v2107 = vld [vmem:[#allocation8 + $0x34] sm:$0xf]
    %v2108 = vld [vmem:[#allocation8 + $0x38] sm:$0xf]
    %v2109 = vld [vmem:[#allocation8 + $0x3c] sm:$0xf]
    %v2110 = vld [vmem:[#allocation8 + $0x40] sm:$0xf]
    %v2111 = vld [vmem:[#allocation8 + $0x44] sm:$0xf]
    %v2112 = vld [vmem:[#allocation8 + $0x48] sm:$0xf]
    %v2113 = vld [vmem:[#allocation8 + $0x4c] sm:$0xf]
    %v2114 = vld [vmem:[#allocation8 + $0x50] sm:$0xf]
    %v2115 = vld [vmem:[#allocation8 + $0x54] sm:$0xf]
    %v2116 = vld [vmem:[#allocation8 + $0x58] sm:$0xf]
    %v2117 = vld [vmem:[#allocation8 + $0x5c] sm:$0xf]
    %v2118 = vld [vmem:[#allocation8 + $0x60] sm:$0xf]
    %v2119 = vld [vmem:[#allocation8 + $0x64] sm:$0xf]
    %v2120 = vld [vmem:[#allocation8 + $0x68] sm:$0xf]
    %v2121 = vld [vmem:[#allocation8 + $0x6c] sm:$0xf]
    %v2122 = vld [vmem:[#allocation8 + $0x70] sm:$0xf]
    %v2123 = vld [vmem:[#allocation8 + $0x74] sm:$0xf]
    %v2124 = vld [vmem:[#allocation8 + $0x78] sm:$0xf]
    %v2125 = vld [vmem:[#allocation8 + $0x7c] sm:$0xf]
    %v2126 = vld [vmem:[#allocation8 + $0x80] sm:$0xf]
    %v2127 = vld [vmem:[#allocation8 + $0x84] sm:$0xf]
    %v2128 = vld [vmem:[#allocation8 + $0x88] sm:$0xf]
    %v2129 = vld [vmem:[#allocation8 + $0x8c] sm:$0xf]
    %v2130 = vld [vmem:[#allocation8 + $0x90] sm:$0xf]
    %v2131 = vld [vmem:[#allocation8 + $0x94] sm:$0xf]
    %v2132 = vld [vmem:[#allocation8 + $0x98] sm:$0xf]
    %v2133 = vld [vmem:[#allocation8 + $0x9c] sm:$0xf]
    %v2134 = vld [vmem:[#allocation8 + $0xa0] sm:$0xf]
    %v2135 = vld [vmem:[#allocation8 + $0xa4] sm:$0xf]
    %v2136 = vld [vmem:[#allocation8 + $0xa8] sm:$0xf]
    %v2137 = vld [vmem:[#allocation8 + $0xac] sm:$0xf]
    %v2138 = vld [vmem:[#allocation8 + $0xb0] sm:$0xf]
    %v2139 = vld [vmem:[#allocation8 + $0xb4] sm:$0xf]
    %v2140 = vld [vmem:[#allocation8 + $0xb8] sm:$0xf]
    %v2141 = vld [vmem:[#allocation8 + $0xbc] sm:$0xf]
    %v2142 = vld [vmem:[#allocation8 + $0xc0] sm:$0xf]
    %v2143 = vld [vmem:[#allocation8 + $0xc4] sm:$0xf]
    %v2144 = vld [vmem:[#allocation8 + $0xc8] sm:$0xf]
    %v2145 = vld [vmem:[#allocation8 + $0xcc] sm:$0xf]
    %v2146 = vld [vmem:[#allocation8 + $0xd0] sm:$0xf]
    %v2147 = vld [vmem:[#allocation8 + $0xd4] sm:$0xf]
    %v2148 = vld [vmem:[#allocation8 + $0xd8] sm:$0xf]
    %v2149 = vld [vmem:[#allocation8 + $0xdc] sm:$0xf]
    %v2150 = vld [vmem:[#allocation8 + $0xe0] sm:$0xf]
    %v2151 = vld [vmem:[#allocation8 + $0xe4] sm:$0xf]
    %v2152 = vld [vmem:[#allocation8 + $0xe8] sm:$0xf]
    %v2153 = vld [vmem:[#allocation8 + $0xec] sm:$0xf]
    %v2154 = vld [vmem:[#allocation8 + $0xf0] sm:$0xf]
    %v2155 = vld [vmem:[#allocation8 + $0xf4] sm:$0xf]
    %v2156 = vld [vmem:[#allocation8 + $0xf8] sm:$0xf]
    %v2157 = vld [vmem:[#allocation8 + $0xfc] sm:$0xf]
    %v2158 = vld [vmem:[#allocation10] sm:$0x1]
    %v2160 = vperm.slane %v2158, 0
    %v2226 = vunpack.c.l.b16 %v2094
    %v2227 = vunpack.c.l.b16 %v2095
    %v2228 = vunpack.c.l.b16 %v2096
    %v2229 = vunpack.c.l.b16 %v2097
    %v2230 = vunpack.c.l.b16 %v2098
    %v2231 = vunpack.c.l.b16 %v2099
    %v2232 = vunpack.c.l.b16 %v2100
    %v2233 = vunpack.c.l.b16 %v2101
    %v2234 = vunpack.c.l.b16 %v2102
    %v2235 = vunpack.c.l.b16 %v2103
    %v2236 = vunpack.c.l.b16 %v2104
    %v2237 = vunpack.c.l.b16 %v2105
    %v2238 = vunpack.c.l.b16 %v2106
    %v2239 = vunpack.c.l.b16 %v2107
    %v2240 = vunpack.c.l.b16 %v2108
    %v2241 = vunpack.c.l.b16 %v2109
    %v2242 = vunpack.c.l.b16 %v2110
    %v2243 = vunpack.c.l.b16 %v2111
    %v2244 = vunpack.c.l.b16 %v2112
    %v2245 = vunpack.c.l.b16 %v2113
    %v2246 = vunpack.c.l.b16 %v2114
    %v2247 = vunpack.c.l.b16 %v2115
    %v2248 = vunpack.c.l.b16 %v2116
    %v2249 = vunpack.c.l.b16 %v2117
    %v2250 = vunpack.c.l.b16 %v2118
    %v2251 = vunpack.c.l.b16 %v2119
    %v2252 = vunpack.c.l.b16 %v2120
    %v2253 = vunpack.c.l.b16 %v2121
    %v2254 = vunpack.c.l.b16 %v2122
    %v2255 = vunpack.c.l.b16 %v2123
    %v2256 = vunpack.c.l.b16 %v2124
    %v2257 = vunpack.c.l.b16 %v2125
    %v2258 = vunpack.c.l.b16 %v2126
    %v2259 = vunpack.c.l.b16 %v2127
    %v2260 = vunpack.c.l.b16 %v2128
    %v2261 = vunpack.c.l.b16 %v2129
    %v2262 = vunpack.c.l.b16 %v2130
    %v2263 = vunpack.c.l.b16 %v2131
    %v2264 = vunpack.c.l.b16 %v2132
    %v2265 = vunpack.c.l.b16 %v2133
    %v2266 = vunpack.c.l.b16 %v2134
    %v2267 = vunpack.c.l.b16 %v2135
    %v2268 = vunpack.c.l.b16 %v2136
    %v2269 = vunpack.c.l.b16 %v2137
    %v2270 = vunpack.c.l.b16 %v2138
    %v2271 = vunpack.c.l.b16 %v2139
    %v2272 = vunpack.c.l.b16 %v2140
    %v2273 = vunpack.c.l.b16 %v2141
    %v2274 = vunpack.c.l.b16 %v2142
    %v2275 = vunpack.c.l.b16 %v2143
    %v2276 = vunpack.c.l.b16 %v2144
    %v2277 = vunpack.c.l.b16 %v2145
    %v2278 = vunpack.c.l.b16 %v2146
    %v2279 = vunpack.c.l.b16 %v2147
    %v2280 = vunpack.c.l.b16 %v2148
    %v2281 = vunpack.c.l.b16 %v2149
    %v2282 = vunpack.c.l.b16 %v2150
    %v2283 = vunpack.c.l.b16 %v2151
    %v2284 = vunpack.c.l.b16 %v2152
    %v2285 = vunpack.c.l.b16 %v2153
    %v2286 = vunpack.c.l.b16 %v2154
    %v2287 = vunpack.c.l.b16 %v2155
    %v2288 = vunpack.c.l.b16 %v2156
    %v2289 = vunpack.c.l.b16 %v2157
    %v2290 = vpack.c.b16 %v2227, %v2226
    %v2291 = vpack.c.b16 %v2229, %v2228
    %v2292 = vpack.c.b16 %v2231, %v2230
    %v2293 = vpack.c.b16 %v2233, %v2232
    %v2294 = vpack.c.b16 %v2235, %v2234
    %v2295 = vpack.c.b16 %v2237, %v2236
    %v2296 = vpack.c.b16 %v2239, %v2238
    %v2297 = vpack.c.b16 %v2241, %v2240
    %v2298 = vpack.c.b16 %v2243, %v2242
    %v2299 = vpack.c.b16 %v2245, %v2244
    %v2300 = vpack.c.b16 %v2247, %v2246
    %v2301 = vpack.c.b16 %v2249, %v2248
    %v2302 = vpack.c.b16 %v2251, %v2250
    %v2303 = vpack.c.b16 %v2253, %v2252
    %v2304 = vpack.c.b16 %v2255, %v2254
    %v2305 = vpack.c.b16 %v2257, %v2256
    %v2306 = vpack.c.b16 %v2259, %v2258
    %v2307 = vpack.c.b16 %v2261, %v2260
    %v2308 = vpack.c.b16 %v2263, %v2262
    %v2309 = vpack.c.b16 %v2265, %v2264
    %v2310 = vpack.c.b16 %v2267, %v2266
    %v2311 = vpack.c.b16 %v2269, %v2268
    %v2312 = vpack.c.b16 %v2271, %v2270
    %v2313 = vpack.c.b16 %v2273, %v2272
    %v2314 = vpack.c.b16 %v2275, %v2274
    %v2315 = vpack.c.b16 %v2277, %v2276
    %v2316 = vpack.c.b16 %v2279, %v2278
    %v2317 = vpack.c.b16 %v2281, %v2280
    %v2318 = vpack.c.b16 %v2283, %v2282
    %v2319 = vpack.c.b16 %v2285, %v2284
    %v2320 = vpack.c.b16 %v2287, %v2286
    %v2321 = vpack.c.b16 %v2289, %v2288
    %2354 = vmatpush.bf16.msra.mxu0 %v2297
    %2355 = vmatpush.bf16.msra.mxu0 %v2296
    %2356 = vmatpush.bf16.msra.mxu0 %v2295
    %2357 = vmatpush.bf16.msra.mxu0 %v2294
    %2358 = vmatpush.bf16.msra.mxu0 %v2293
    %2359 = vmatpush.bf16.msra.mxu0 %v2292
    %2360 = vmatpush.bf16.msra.mxu0 %v2291
    %2361 = vmatpush.bf16.msra.mxu0 %v2290
    %2362 = vmatmul.bf16.gmra.mxu0 %v2090
    %v2363 = vpop.f32.mrf.mxu0
    %v2364 = vadd.f32 %v2160, %v2363
    %v2365 = vpop.f32.mrf.mxu0
    %2366 = vdwg.mxu0
    %2367 = vmatpush.bf16.msra.mxu0 %v2305
    %2368 = vmatpush.bf16.msra.mxu0 %v2304
    %2369 = vmatpush.bf16.msra.mxu0 %v2303
    %2370 = vmatpush.bf16.msra.mxu0 %v2302
    %2371 = vmatpush.bf16.msra.mxu0 %v2301
    %2372 = vmatpush.bf16.msra.mxu0 %v2300
    %2373 = vmatpush.bf16.msra.mxu0 %v2299
    %2374 = vmatpush.bf16.msra.mxu0 %v2298
    %2375 = vmatmul.bf16.gmra.mxu0 %v2091
    %v2376 = vpop.f32.mrf.mxu0
    %v2377 = vadd.f32 %v2364, %v2376
    %v2378 = vpop.f32.mrf.mxu0
    %2379 = vdwg.mxu0
    %2380 = vmatpush.bf16.msra.mxu0 %v2313
    %2381 = vmatpush.bf16.msra.mxu0 %v2312
    %2382 = vmatpush.bf16.msra.mxu0 %v2311
    %2383 = vmatpush.bf16.msra.mxu0 %v2310
    %2384 = vmatpush.bf16.msra.mxu0 %v2309
    %2385 = vmatpush.bf16.msra.mxu0 %v2308
    %2386 = vmatpush.bf16.msra.mxu0 %v2307
    %2387 = vmatpush.bf16.msra.mxu0 %v2306
    %2388 = vmatmul.bf16.gmra.mxu0 %v2092
    %v2389 = vpop.f32.mrf.mxu0
    %v2390 = vadd.f32 %v2377, %v2389
    %v2391 = vpop.f32.mrf.mxu0
    %2392 = vdwg.mxu0
    %2393 = vmatpush.bf16.msra.mxu0 %v2321
    %2394 = vmatpush.bf16.msra.mxu0 %v2320
    %2395 = vmatpush.bf16.msra.mxu0 %v2319
    %2396 = vmatpush.bf16.msra.mxu0 %v2318
    %2397 = vmatpush.bf16.msra.mxu0 %v2317
    %2398 = vmatpush.bf16.msra.mxu0 %v2316
    %2399 = vmatpush.bf16.msra.mxu0 %v2315
    %2400 = vmatpush.bf16.msra.mxu0 %v2314
    %2401 = vmatmul.bf16.gmra.mxu0 %v2093
    %v2402 = vpop.f32.mrf.mxu0
    %v2403 = vadd.f32 %v2390, %v2402
    %v2404 = vpop.f32.mrf.mxu0
    %2405 = vdwg.mxu0
    %v2406 = vmul.f32 %v2403, %v2403
    %vm2407 = vcmask 1041408
    %v2408 = vsel %vm2407, %v2406, 0.0
    %2409 = vadd.xlane.f32.xlu0 %v2408
    %v2410 = vpop.xlane.xlu0 %2409
    %v2411 = vmax.f32 %v2410, 1e-24
    %v2412 = vrsqrt.pop %v2411
    %v2413 = vmul.f32 %v2412, %v2411
    %v2414 = vmul.f32 %v2413, %v2412
    %v2415 = vmul.f32 0.5, %v2414
    %v2416 = vsub.f32 1.5, %v2415
    %v2417 = vmul.f32 %v2412, %v2416
    %vm2418 = vweird.f32 %v2411
    %vm2419 = vweird.f32 %v2412
    %vm2420 = vmor %vm2418, %vm2419
    %v2421 = vsel %vm2420, %v2412, %v2417
    %v2422 = vmul.f32 %v2403, %v2421
    %2423 = vst [vmem:[#allocation11] sm:$0x3] %v2422
    // Predicated region
    $region42: #{projection_forward.1} parent=1 // pred_check
      _
    $region43: #{projection_forward.1} parent=1 // pred_check_branch
      %2425 = sbr.rel (0) target = $region45
    $region44: #{projection_forward.1} parent=1 // pred_region
      %2427 = vsyncadd [#allocation4], 0
      %s2429 = sshll.u32 [#allocation11], 4
      %s2430 = int_to_ptr.vmem [resolvable:$true] %s2429
      %s2431 = sshll.u32 %s5, 4
      %s2432 = int_to_ptr.hbm [resolvable:$true] %s2431
      %2434 = dma.vmem_to_hbm [thread:$0]  %s2430, 32, %s2432, [#allocation4]
    $region45: #{projection_forward.1} parent=1 // pred_fallthru
      _
    // Predicated region
    $region46: #{projection_forward.1} parent=1 // pred_check
      _
    $region47: #{projection_forward.1} parent=1 // pred_check_branch
      %2436 = sbr.rel (0) target = $region49
    $region48: #{projection_forward.1} parent=1 // pred_region
      %2438 = dma.done [#allocation4], 32
    $region49: #{projection_forward.1} parent=1 // pred_fallthru
      _
    %2439 = vsyncpa [#allocation3], 1
    %2440 = vsyncpa [#allocation6], 1
    %2441 = vsyncpa [#allocation9], 1
    %2442 = vsyncpa [#allocation4], 1

</llo_original>
